<compile_context>
chip_gen: v7x
topology: tpu7x:2x2x1
jax: 0.10.0
libtpu: 0.0.40
codegen_flags: <defaults>
</compile_context>

<pallas_src>
import functools

import jax
import jax.numpy as jnp
from jax import lax
from jax.experimental import pallas as pl
from jax.experimental.pallas import tpu as pltpu

LANE = 128          # channel (lane) padding quantum
WTILE = 8           # output-width (sublane) padding quantum for the f32 in-kernel tiles
BN_EPS = 1e-5


def _rup(x, m):
    return ((x + m - 1) // m) * m


_VMEM_LIMIT = None


def _vmem_limit_bytes():
    """Generation-aware VMEM budget: ~half of physical (32 MiB on v7x, 64 MiB on v5e/v6e)."""
    global _VMEM_LIMIT
    if _VMEM_LIMIT is None:
        try:
            phys = pltpu.get_tpu_info().vmem_capacity_bytes
            _VMEM_LIMIT = int(max(32 << 20, min(phys // 2, 96 << 20)))
        except Exception:
            _VMEM_LIMIT = 32 << 20
    return _VMEM_LIMIT


# --------------------------------------------------------------------------- fused segment kernel

def _segment_kernel(*refs, head_kind, n_units, ho, wo, wp, cp):
    """One stride-segment of the network, fully fused in VMEM.

    Head: either the im2col'd init 3x3 conv (a single MXU matmul) or a stride-2
    depthwise-separable unit (phase-decimated input).  Tail: n_units stride-1
    depthwise-separable units chained through a halo-padded f32 VMEM scratch
    (no HBM round trips inside a segment).

    refs = [x, head weights..., per-unit (dw_w, dw_b, pw_w, pw_b)..., out, (act scratch)]
    """
    nhw = 2 if head_kind == "init" else 4
    x_ref = refs[0]
    head_w = refs[1:1 + nhw]
    unit_w = refs[1 + nhw:1 + nhw + 4 * n_units]
    o_ref = refs[1 + nhw + 4 * n_units]
    act_ref = refs[2 + nhw + 4 * n_units] if n_units else None

    # Zero the padded width columns so halo / phase-decimation taps never read garbage.
    keep = lax.broadcasted_iota(jnp.int32, (wp, 1), 0) < wo

    def dws_block(read_tap, dw_w, dw_b, pw_w, pw_b):
        acc = None
        for kh in range(3):
            for kw in range(3):
                t = read_tap(kh, kw) * dw_w[kh * 3 + kw]            # f32 taps, f32 MAC (VPU)
                acc = t if acc is None else acc + t
        z = jnp.maximum(acc + dw_b[...], 0.0)                        # depthwise BN-bias + ReLU
        z = z.reshape(ho * wp, cp).astype(jnp.bfloat16)              # wp % 8 == 0 -> clean reshape
        y = jnp.dot(z, pw_w[...], preferred_element_type=jnp.float32)  # 1x1 pointwise (MXU)
        y = jnp.maximum(y + pw_b[...], 0.0).reshape(ho, wp, cp)      # pointwise BN-bias + ReLU
        return jnp.where(keep, y, 0.0)

    if head_kind == "init":
        # x_ref: (1, ho*wp, 9*in_channels padded) im2col'd input; one small-K MXU matmul.
        w_ref, b_ref = head_w
        y = jnp.dot(x_ref[0], w_ref[...], preferred_element_type=jnp.float32)
        y = jnp.maximum(y + b_ref[...], 0.0).reshape(ho, wp, cp)
        y = jnp.where(keep, y, 0.0)
    else:
        # x_ref: (1, 4, ho+1, wp+1, cp) phase-decimated, phases[p*2+q,m,l,c] = xpad[2m+p,2l+q,c]
        def tap_s2(kh, kw):
            return x_ref[0, (kh % 2) * 2 + (kw % 2),
                         pl.ds(kh // 2, ho), pl.ds(kw // 2, wp), :].astype(jnp.float32)

        y = dws_block(tap_s2, *head_w)

    if n_units:
        # Halo-padded f32 activation, resident in VMEM across all fused stride-1 units.
        act_ref[...] = jnp.zeros(act_ref.shape, jnp.float32)

        def tap_s1(kh, kw):
            return act_ref[pl.ds(kh, ho), pl.ds(kw, wp), :]          # already f32: convert once

        act_ref[pl.ds(1, ho), pl.ds(1, wp), :] = y
        for u in range(n_units):
            y = dws_block(tap_s1, *unit_w[4 * u:4 * u + 4])
            if u + 1 < n_units:
                act_ref[pl.ds(1, ho), pl.ds(1, wp), :] = y

    o_ref[...] = y.reshape(1, ho, wp, cp).astype(o_ref.dtype)


def _pool_fc_kernel(x_ref, w_ref, b_ref, o_ref, *, inv_area):
    """AvgPool2d(7) on the (zero-padded-width) 7x7 map fused with the output Linear."""
    pooled = jnp.sum(x_ref[...].astype(jnp.float32), axis=1) * inv_area   # (N, cp)
    o_ref[...] = jnp.dot(pooled, w_ref[...],
                         preferred_element_type=jnp.float32) + b_ref[...]


# --------------------------------------------------------------------------- pallas wrappers

def _run_segment(x_in, weights, *, head_kind, n_units, n, ho, wo, wp, cp):
    kernel = functools.partial(_segment_kernel, head_kind=head_kind, n_units=n_units,
                               ho=ho, wo=wo, wp=wp, cp=cp)
    in_specs = [pl.BlockSpec((1,) + x_in.shape[1:],
                             lambda b, _nd=x_in.ndim: (b,) + (0,) * (_nd - 1))]
    for wgt in weights:
        in_specs.append(pl.BlockSpec(wgt.shape, lambda b, _nd=wgt.ndim: (0,) * _nd))
    scratch = [pltpu.VMEM((ho + 2, wp + 2, cp), jnp.float32)] if n_units else []
    return pl.pallas_call(
        kernel,
        out_shape=jax.ShapeDtypeStruct((n, ho, wp, cp), jnp.bfloat16),
        grid=(n,),
        in_specs=in_specs,
        out_specs=pl.BlockSpec((1, ho, wp, cp), lambda b: (b, 0, 0, 0)),
        scratch_shapes=scratch,
        compiler_params=pltpu.CompilerParams(
            dimension_semantics=("parallel",),
            vmem_limit_bytes=_vmem_limit_bytes()),
    )(x_in, *weights)


# --------------------------------------------------------------------------- JAX glue (cheap, only at stride-2 boundaries)

def _im2col_init(x, ho, wo, wp, kdim):
    """3x3 / stride-2 / pad-1 im2col of the raw few-channel input -> (n, ho*wp, kdim) bf16."""
    n, h, w, cin = x.shape
    xp = jnp.pad(x, ((0, 0), (1, 2 * ho - h), (1, 2 * wo - w), (0, 0)))
    taps = [xp[:, kh:kh + 2 * ho:2, kw:kw + 2 * wo:2, :]
            for kh in range(3) for kw in range(3)]
    col = jnp.stack(taps, axis=-2).reshape(n, ho, wo, 9 * cin)
    col = jnp.pad(col, ((0, 0), (0, 0), (0, wp - wo), (0, kdim - 9 * cin)))
    return col.reshape(n, ho * wp, kdim).astype(jnp.bfloat16)


def _prep_stride2(x, ho, wp_out):
    """Phase-decimate so the stride-2 head's taps stay contiguous:
    out[n, p*2+q, m, l, c] = xpad[n, 2m+p, 2l+q, c]."""
    n, h, w, c = x.shape
    rows, cols = 2 * (ho + 1), 2 * (wp_out + 1)
    xp = jnp.pad(x, ((0, 0), (1, rows - h - 1), (1, cols - w - 1), (0, 0)))
    xp = xp.reshape(n, ho + 1, 2, wp_out + 1, 2, c)
    xp = jnp.transpose(xp, (0, 2, 4, 1, 3, 5))
    return xp.reshape(n, 4, ho + 1, wp_out + 1, c)


# --------------------------------------------------------------------------- params

def init_mobilenet_params(key, channels, first_stage_stride,
                          in_channels=3, num_classes=10):
    """Random weights mirroring MobileNet._init_params, eval-mode BN folded into the convs,
    channels zero-padded to one lane-dense (128) group.  Padded lanes keep exactly-zero
    weights AND biases so the zero-lane invariant survives every fused unit."""
    bn_s = 1.0 / (1.0 + BN_EPS) ** 0.5               # BN: gamma=1, beta=0, mean=0, var=1
    cp = _rup(max(c for st in channels for c in st), LANE)
    ncp = _rup(num_classes, LANE)
    kdim = _rup(9 * in_channels, 8)
    keys = iter(jax.random.split(key, 4 * sum(len(s) for s in channels) + 8))
    p = {"cp": cp, "kdim": kdim, "num_classes": num_classes}

    init_c = channels[0][0]
    w = ((2.0 / (init_c * 9)) ** 0.5) * jax.random.normal(        # init conv: kaiming fan_out
        next(keys), (3, 3, in_channels, init_c), jnp.float32)
    wk = jnp.zeros((kdim, cp), jnp.float32)
    wk = wk.at[:9 * in_channels, :init_c].set(w.reshape(9 * in_channels, init_c) * bn_s)
    p["init_w"] = wk.astype(jnp.bfloat16)
    p["init_b"] = jnp.zeros((1, cp), jnp.float32)

    in_c = init_c
    units = []
    for i, stage in enumerate(channels[1:]):
        for j, out_c in enumerate(stage):
            stride = 2 if j == 0 and (i != 0 or first_stage_stride) else 1
            dw = ((2.0 / 9.0) ** 0.5) * jax.random.normal(         # dw conv: kaiming fan_in (=9)
                next(keys), (9, in_c), jnp.float32)
            dww = jnp.zeros((9, 1, cp), jnp.float32).at[:, 0, :in_c].set(dw * bn_s)
            pw = ((2.0 / out_c) ** 0.5) * jax.random.normal(       # pw conv: kaiming fan_out
                next(keys), (in_c, out_c), jnp.float32)
            pww = jnp.zeros((cp, cp), jnp.float32).at[:in_c, :out_c].set(pw * bn_s)
            units.append(dict(stride=stride,
                              dw_w=dww, dw_b=jnp.zeros((1, cp), jnp.float32),
                              pw_w=pww.astype(jnp.bfloat16),
                              pw_b=jnp.zeros((1, cp), jnp.float32)))
            in_c = out_c
    p["units"] = units

    ow = ((2.0 / num_classes) ** 0.5) * jax.random.normal(         # output Linear: kaiming fan_out
        next(keys), (in_c, num_classes), jnp.float32)
    p["out_w"] = jnp.zeros((cp, ncp), jnp.float32).at[:in_c, :num_classes].set(ow)
    p["out_b"] = jnp.zeros((1, ncp), jnp.float32)
    return p


# --------------------------------------------------------------------------- forward

def mobilenet_forward(params, x_nchw):
    cp, kdim = params["cp"], params["kdim"]
    x = jnp.transpose(x_nchw, (0, 2, 3, 1))                       # NCHW -> NHWC (raw channels)
    n, h, w, _ = x.shape

    # Segmentation: init conv + trailing stride-1 units = segment 0; each stride-2 unit starts
    # a new fused segment (its input gets the cheap JAX-side phase decimation).
    segments = [dict(head="init", head_w=(params["init_w"], params["init_b"]), units=[])]
    for u in params["units"]:
        if u["stride"] == 2:
            segments.append(dict(head="dws2",
                                 head_w=(u["dw_w"], u["dw_b"], u["pw_w"], u["pw_b"]),
                                 units=[]))
        else:
            segments[-1]["units"].append(u)

    act, wp = None, None
    for seg in segments:
        ho, wo = (h + 1) // 2, (w + 1) // 2                        # 3x3, stride 2, pad 1
        wp = _rup(wo, WTILE)
        if seg["head"] == "init":
            x_in = _im2col_init(x, ho, wo, wp, kdim)
        else:
            x_in = _prep_stride2(act, ho, wp)
        weights = list(seg["head_w"])
        for u in seg["units"]:
            weights += [u["dw_w"], u["dw_b"], u["pw_w"], u["pw_b"]]
        act = _run_segment(x_in, weights, head_kind=seg["head"], n_units=len(seg["units"]),
                           n=n, ho=ho, wo=wo, wp=wp, cp=cp)
        h, w = ho, wo

    assert h == 7 and w == 7, "AvgPool2d(7) expects a 7x7 final feature map"
    # final_pool (global mean on the zero-padded 7x7 map) fused with the output Linear
    logits = pl.pallas_call(
        functools.partial(_pool_fc_kernel, inv_area=1.0 / (h * w)),
        out_shape=jax.ShapeDtypeStruct((n, params["out_w"].shape[-1]), jnp.float32),
    )(act.reshape(n, h * wp, cp), params["out_w"], params["out_b"])
    return logits[:, :params["num_classes"]]


# --------------------------------------------------------------------------- main

if __name__ == "__main__":
    # Small MobileNet config: total stride 4 -> 28x28 input gives the 7x7 map AvgPool2d(7) expects.
    channels = [[8], [16], [32, 32]]
    first_stage_stride = False
    num_classes = 10
    batch, in_channels, in_size = 2, 3, 28

    k_params, k_x = jax.random.split(jax.random.PRNGKey(0))
    params = init_mobilenet_params(k_params, channels, first_stage_stride,
                                   in_channels=in_channels, num_classes=num_classes)
    x = jax.random.normal(k_x, (batch, in_channels, in_size, in_size), jnp.float32)

    logits = mobilenet_forward(params, x)
    jax.block_until_ready(logits)
    assert logits.shape == (batch, num_classes)
    print("KERNEL_OK")
</pallas_src>

<mosaic_0001>
module attributes {stable_mosaic.version = 11 : i64} {
  func.func @_segment_kernel(%arg0: i32, %arg1: memref<1x224x32xbf16, #tpu.memory_space<vmem>>, %arg2: memref<32x128xbf16, #tpu.memory_space<vmem>>, %arg3: memref<1x128xf32, #tpu.memory_space<vmem>>, %arg4: memref<9x1x128xf32, #tpu.memory_space<vmem>>, %arg5: memref<1x128xf32, #tpu.memory_space<vmem>>, %arg6: memref<128x128xbf16, #tpu.memory_space<vmem>>, %arg7: memref<1x128xf32, #tpu.memory_space<vmem>>, %arg8: memref<1x14x16x128xbf16, #tpu.memory_space<vmem>>, %arg9: memref<16x18x128xf32, #tpu.memory_space<vmem>>) attributes {dimension_semantics = [#tpu.dimension_semantics<parallel>], iteration_bounds = array<i64: 2>, scalar_prefetch = 0 : i64, scratch_operands = 1 : i64, tpu.core_type = #tpu.core_type<tc>, window_params = [{transform_indices = @transform_0, window_bounds = array<i64: 1, 224, 32>}, {pipeline_mode = #tpu.pipeline_mode<synchronous>, transform_indices = @transform_1, window_bounds = array<i64: 32, 128>}, {pipeline_mode = #tpu.pipeline_mode<synchronous>, transform_indices = @transform_2, window_bounds = array<i64: 1, 128>}, {pipeline_mode = #tpu.pipeline_mode<synchronous>, transform_indices = @transform_3, window_bounds = array<i64: 9, 1, 128>}, {pipeline_mode = #tpu.pipeline_mode<synchronous>, transform_indices = @transform_4, window_bounds = array<i64: 1, 128>}, {pipeline_mode = #tpu.pipeline_mode<synchronous>, transform_indices = @transform_5, window_bounds = array<i64: 128, 128>}, {pipeline_mode = #tpu.pipeline_mode<synchronous>, transform_indices = @transform_6, window_bounds = array<i64: 1, 128>}, {transform_indices = @transform_7, window_bounds = array<i64: 1, 14, 16, 128>}]} {
    %0 = tpu.iota {dimensions = array<i32: 0>} : vector<16x1xi32>
    %c14_i32 = arith.constant 14 : i32
    %1 = vector.broadcast %c14_i32 : i32 to vector<16x1xi32>
    %2 = arith.cmpi slt, %0, %1 : vector<16x1xi32>
    %c0 = arith.constant 0 : index
    %c0_0 = arith.constant 0 : index
    %c0_1 = arith.constant 0 : index
    %3 = vector.load %arg1[%c0, %c0_0, %c0_1] : memref<1x224x32xbf16, #tpu.memory_space<vmem>>, vector<1x224x32xbf16>
    %4 = vector.shape_cast %3 : vector<1x224x32xbf16> to vector<224x32xbf16>
    %c0_2 = arith.constant 0 : index
    %c0_3 = arith.constant 0 : index
    %5 = vector.load %arg2[%c0_2, %c0_3] : memref<32x128xbf16, #tpu.memory_space<vmem>>, vector<32x128xbf16>
    %cst = arith.constant dense<0.000000e+00> : vector<224x128xf32>
    %6 = tpu.matmul %4, %5, %cst {dimension_numbers = #tpu.dot_dimension_numbers<[1], [0], [0], [1], [0, 0, 1, 1], [], []>} : vector<224x32xbf16>, vector<32x128xbf16>, vector<224x128xf32> -> vector<224x128xf32>
    %c0_4 = arith.constant 0 : index
    %c0_5 = arith.constant 0 : index
    %7 = vector.load %arg3[%c0_4, %c0_5] : memref<1x128xf32, #tpu.memory_space<vmem>>, vector<1x128xf32>
    %8 = vector.broadcast %7 : vector<1x128xf32> to vector<224x128xf32>
    %9 = arith.addf %6, %8 : vector<224x128xf32>
    %cst_6 = arith.constant 0.000000e+00 : f32
    %10 = vector.broadcast %cst_6 : f32 to vector<224x128xf32>
    %11 = arith.maximumf %9, %10 : vector<224x128xf32>
    %12 = vector.shape_cast %11 : vector<224x128xf32> to vector<14x16x128xf32>
    %cst_7 = arith.constant 0.000000e+00 : f32
    %13 = vector.shape_cast %2 : vector<16x1xi1> to vector<1x16x1xi1>
    %14 = vector.broadcast %13 : vector<1x16x1xi1> to vector<14x16x128xi1>
    %15 = vector.broadcast %cst_7 : f32 to vector<14x16x128xf32>
    %16 = arith.select %14, %12, %15 : vector<14x16x128xi1>, vector<14x16x128xf32>
    %cst_8 = arith.constant 0.000000e+00 : f32
    %17 = vector.broadcast %cst_8 : f32 to vector<16x18x128xf32>
    %c0_9 = arith.constant 0 : index
    %c0_10 = arith.constant 0 : index
    %c0_11 = arith.constant 0 : index
    %18 = vector.load %arg9[%c0_9, %c0_10, %c0_11] : memref<16x18x128xf32, #tpu.memory_space<vmem>>, vector<16x18x128xf32>
    tpu.vector_store %arg9[%c0_9, %c0_10, %c0_11], %17 {strides = array<i32>} : memref<16x18x128xf32, #tpu.memory_space<vmem>>, vector<16x18x128xf32>,
    %c1 = arith.constant 1 : index
    %c1_12 = arith.constant 1 : index
    %c0_13 = arith.constant 0 : index
    %19 = vector.load %arg9[%c1, %c1_12, %c0_13] : memref<16x18x128xf32, #tpu.memory_space<vmem>>, vector<14x16x128xf32>
    tpu.vector_store %arg9[%c1, %c1_12, %c0_13], %16 {strides = array<i32>} : memref<16x18x128xf32, #tpu.memory_space<vmem>>, vector<14x16x128xf32>,
    %c0_14 = arith.constant 0 : index
    %c0_15 = arith.constant 0 : index
    %c0_16 = arith.constant 0 : index
    %20 = vector.load %arg9[%c0_14, %c0_15, %c0_16] : memref<16x18x128xf32, #tpu.memory_space<vmem>>, vector<14x16x128xf32>
    %c0_17 = arith.constant 0 : index
    %c0_18 = arith.constant 0 : index
    %c0_19 = arith.constant 0 : index
    %21 = vector.load %arg4[%c0_17, %c0_18, %c0_19] : memref<9x1x128xf32, #tpu.memory_space<vmem>>, vector<1x1x128xf32>
    %22 = vector.shape_cast %21 : vector<1x1x128xf32> to vector<1x128xf32>
    %23 = vector.shape_cast %22 : vector<1x128xf32> to vector<1x1x128xf32>
    %24 = vector.broadcast %23 : vector<1x1x128xf32> to vector<14x16x128xf32>
    %25 = arith.mulf %20, %24 : vector<14x16x128xf32>
    %c0_20 = arith.constant 0 : index
    %c1_21 = arith.constant 1 : index
    %c0_22 = arith.constant 0 : index
    %26 = vector.load %arg9[%c0_20, %c1_21, %c0_22] : memref<16x18x128xf32, #tpu.memory_space<vmem>>, vector<14x16x128xf32>
    %c1_23 = arith.constant 1 : index
    %c0_24 = arith.constant 0 : index
    %c0_25 = arith.constant 0 : index
    %27 = vector.load %arg4[%c1_23, %c0_24, %c0_25] : memref<9x1x128xf32, #tpu.memory_space<vmem>>, vector<1x1x128xf32>
    %28 = vector.shape_cast %27 : vector<1x1x128xf32> to vector<1x128xf32>
    %29 = vector.shape_cast %28 : vector<1x128xf32> to vector<1x1x128xf32>
    %30 = vector.broadcast %29 : vector<1x1x128xf32> to vector<14x16x128xf32>
    %31 = arith.mulf %26, %30 : vector<14x16x128xf32>
    %32 = arith.addf %25, %31 : vector<14x16x128xf32>
    %c0_26 = arith.constant 0 : index
    %c2 = arith.constant 2 : index
    %c0_27 = arith.constant 0 : index
    %33 = vector.load %arg9[%c0_26, %c2, %c0_27] : memref<16x18x128xf32, #tpu.memory_space<vmem>>, vector<14x16x128xf32>
    %c2_28 = arith.constant 2 : index
    %c0_29 = arith.constant 0 : index
    %c0_30 = arith.constant 0 : index
    %34 = vector.load %arg4[%c2_28, %c0_29, %c0_30] : memref<9x1x128xf32, #tpu.memory_space<vmem>>, vector<1x1x128xf32>
    %35 = vector.shape_cast %34 : vector<1x1x128xf32> to vector<1x128xf32>
    %36 = vector.shape_cast %35 : vector<1x128xf32> to vector<1x1x128xf32>
    %37 = vector.broadcast %36 : vector<1x1x128xf32> to vector<14x16x128xf32>
    %38 = arith.mulf %33, %37 : vector<14x16x128xf32>
    %39 = arith.addf %32, %38 : vector<14x16x128xf32>
    %c1_31 = arith.constant 1 : index
    %c0_32 = arith.constant 0 : index
    %c0_33 = arith.constant 0 : index
    %40 = vector.load %arg9[%c1_31, %c0_32, %c0_33] : memref<16x18x128xf32, #tpu.memory_space<vmem>>, vector<14x16x128xf32>
    %c3 = arith.constant 3 : index
    %c0_34 = arith.constant 0 : index
    %c0_35 = arith.constant 0 : index
    %41 = vector.load %arg4[%c3, %c0_34, %c0_35] : memref<9x1x128xf32, #tpu.memory_space<vmem>>, vector<1x1x128xf32>
    %42 = vector.shape_cast %41 : vector<1x1x128xf32> to vector<1x128xf32>
    %43 = vector.shape_cast %42 : vector<1x128xf32> to vector<1x1x128xf32>
    %44 = vector.broadcast %43 : vector<1x1x128xf32> to vector<14x16x128xf32>
    %45 = arith.mulf %40, %44 : vector<14x16x128xf32>
    %46 = arith.addf %39, %45 : vector<14x16x128xf32>
    %c1_36 = arith.constant 1 : index
    %c1_37 = arith.constant 1 : index
    %c0_38 = arith.constant 0 : index
    %47 = vector.load %arg9[%c1_36, %c1_37, %c0_38] : memref<16x18x128xf32, #tpu.memory_space<vmem>>, vector<14x16x128xf32>
    %c4 = arith.constant 4 : index
    %c0_39 = arith.constant 0 : index
    %c0_40 = arith.constant 0 : index
    %48 = vector.load %arg4[%c4, %c0_39, %c0_40] : memref<9x1x128xf32, #tpu.memory_space<vmem>>, vector<1x1x128xf32>
    %49 = vector.shape_cast %48 : vector<1x1x128xf32> to vector<1x128xf32>
    %50 = vector.shape_cast %49 : vector<1x128xf32> to vector<1x1x128xf32>
    %51 = vector.broadcast %50 : vector<1x1x128xf32> to vector<14x16x128xf32>
    %52 = arith.mulf %47, %51 : vector<14x16x128xf32>
    %53 = arith.addf %46, %52 : vector<14x16x128xf32>
    %c1_41 = arith.constant 1 : index
    %c2_42 = arith.constant 2 : index
    %c0_43 = arith.constant 0 : index
    %54 = vector.load %arg9[%c1_41, %c2_42, %c0_43] : memref<16x18x128xf32, #tpu.memory_space<vmem>>, vector<14x16x128xf32>
    %c5 = arith.constant 5 : index
    %c0_44 = arith.constant 0 : index
    %c0_45 = arith.constant 0 : index
    %55 = vector.load %arg4[%c5, %c0_44, %c0_45] : memref<9x1x128xf32, #tpu.memory_space<vmem>>, vector<1x1x128xf32>
    %56 = vector.shape_cast %55 : vector<1x1x128xf32> to vector<1x128xf32>
    %57 = vector.shape_cast %56 : vector<1x128xf32> to vector<1x1x128xf32>
    %58 = vector.broadcast %57 : vector<1x1x128xf32> to vector<14x16x128xf32>
    %59 = arith.mulf %54, %58 : vector<14x16x128xf32>
    %60 = arith.addf %53, %59 : vector<14x16x128xf32>
    %c2_46 = arith.constant 2 : index
    %c0_47 = arith.constant 0 : index
    %c0_48 = arith.constant 0 : index
    %61 = vector.load %arg9[%c2_46, %c0_47, %c0_48] : memref<16x18x128xf32, #tpu.memory_space<vmem>>, vector<14x16x128xf32>
    %c6 = arith.constant 6 : index
    %c0_49 = arith.constant 0 : index
    %c0_50 = arith.constant 0 : index
    %62 = vector.load %arg4[%c6, %c0_49, %c0_50] : memref<9x1x128xf32, #tpu.memory_space<vmem>>, vector<1x1x128xf32>
    %63 = vector.shape_cast %62 : vector<1x1x128xf32> to vector<1x128xf32>
    %64 = vector.shape_cast %63 : vector<1x128xf32> to vector<1x1x128xf32>
    %65 = vector.broadcast %64 : vector<1x1x128xf32> to vector<14x16x128xf32>
    %66 = arith.mulf %61, %65 : vector<14x16x128xf32>
    %67 = arith.addf %60, %66 : vector<14x16x128xf32>
    %c2_51 = arith.constant 2 : index
    %c1_52 = arith.constant 1 : index
    %c0_53 = arith.constant 0 : index
    %68 = vector.load %arg9[%c2_51, %c1_52, %c0_53] : memref<16x18x128xf32, #tpu.memory_space<vmem>>, vector<14x16x128xf32>
    %c7 = arith.constant 7 : index
    %c0_54 = arith.constant 0 : index
    %c0_55 = arith.constant 0 : index
    %69 = vector.load %arg4[%c7, %c0_54, %c0_55] : memref<9x1x128xf32, #tpu.memory_space<vmem>>, vector<1x1x128xf32>
    %70 = vector.shape_cast %69 : vector<1x1x128xf32> to vector<1x128xf32>
    %71 = vector.shape_cast %70 : vector<1x128xf32> to vector<1x1x128xf32>
    %72 = vector.broadcast %71 : vector<1x1x128xf32> to vector<14x16x128xf32>
    %73 = arith.mulf %68, %72 : vector<14x16x128xf32>
    %74 = arith.addf %67, %73 : vector<14x16x128xf32>
    %c2_56 = arith.constant 2 : index
    %c2_57 = arith.constant 2 : index
    %c0_58 = arith.constant 0 : index
    %75 = vector.load %arg9[%c2_56, %c2_57, %c0_58] : memref<16x18x128xf32, #tpu.memory_space<vmem>>, vector<14x16x128xf32>
    %c8 = arith.constant 8 : index
    %c0_59 = arith.constant 0 : index
    %c0_60 = arith.constant 0 : index
    %76 = vector.load %arg4[%c8, %c0_59, %c0_60] : memref<9x1x128xf32, #tpu.memory_space<vmem>>, vector<1x1x128xf32>
    %77 = vector.shape_cast %76 : vector<1x1x128xf32> to vector<1x128xf32>
    %78 = vector.shape_cast %77 : vector<1x128xf32> to vector<1x1x128xf32>
    %79 = vector.broadcast %78 : vector<1x1x128xf32> to vector<14x16x128xf32>
    %80 = arith.mulf %75, %79 : vector<14x16x128xf32>
    %81 = arith.addf %74, %80 : vector<14x16x128xf32>
    %c0_61 = arith.constant 0 : index
    %c0_62 = arith.constant 0 : index
    %82 = vector.load %arg5[%c0_61, %c0_62] : memref<1x128xf32, #tpu.memory_space<vmem>>, vector<1x128xf32>
    %83 = vector.shape_cast %82 : vector<1x128xf32> to vector<1x1x128xf32>
    %84 = vector.broadcast %83 : vector<1x1x128xf32> to vector<14x16x128xf32>
    %85 = arith.addf %81, %84 : vector<14x16x128xf32>
    %cst_63 = arith.constant 0.000000e+00 : f32
    %86 = vector.broadcast %cst_63 : f32 to vector<14x16x128xf32>
    %87 = arith.maximumf %85, %86 : vector<14x16x128xf32>
    %88 = vector.shape_cast %87 : vector<14x16x128xf32> to vector<224x128xf32>
    %89 = arith.truncf %88 : vector<224x128xf32> to vector<224x128xbf16>
    %c0_64 = arith.constant 0 : index
    %c0_65 = arith.constant 0 : index
    %90 = vector.load %arg6[%c0_64, %c0_65] : memref<128x128xbf16, #tpu.memory_space<vmem>>, vector<128x128xbf16>
    %cst_66 = arith.constant dense<0.000000e+00> : vector<224x128xf32>
    %91 = tpu.matmul %89, %90, %cst_66 {dimension_numbers = #tpu.dot_dimension_numbers<[1], [0], [0], [1], [0, 0, 1, 1], [], []>} : vector<224x128xbf16>, vector<128x128xbf16>, vector<224x128xf32> -> vector<224x128xf32>
    %c0_67 = arith.constant 0 : index
    %c0_68 = arith.constant 0 : index
    %92 = vector.load %arg7[%c0_67, %c0_68] : memref<1x128xf32, #tpu.memory_space<vmem>>, vector<1x128xf32>
    %93 = vector.broadcast %92 : vector<1x128xf32> to vector<224x128xf32>
    %94 = arith.addf %91, %93 : vector<224x128xf32>
    %cst_69 = arith.constant 0.000000e+00 : f32
    %95 = vector.broadcast %cst_69 : f32 to vector<224x128xf32>
    %96 = arith.maximumf %94, %95 : vector<224x128xf32>
    %97 = vector.shape_cast %96 : vector<224x128xf32> to vector<14x16x128xf32>
    %cst_70 = arith.constant 0.000000e+00 : f32
    %98 = vector.shape_cast %2 : vector<16x1xi1> to vector<1x16x1xi1>
    %99 = vector.broadcast %98 : vector<1x16x1xi1> to vector<14x16x128xi1>
    %100 = vector.broadcast %cst_70 : f32 to vector<14x16x128xf32>
    %101 = arith.select %99, %97, %100 : vector<14x16x128xi1>, vector<14x16x128xf32>
    %102 = vector.shape_cast %101 : vector<14x16x128xf32> to vector<1x14x16x128xf32>
    %103 = arith.truncf %102 : vector<1x14x16x128xf32> to vector<1x14x16x128xbf16>
    %c0_71 = arith.constant 0 : index
    %c0_72 = arith.constant 0 : index
    %c0_73 = arith.constant 0 : index
    %c0_74 = arith.constant 0 : index
    %104 = vector.load %arg8[%c0_71, %c0_72, %c0_73, %c0_74] : memref<1x14x16x128xbf16, #tpu.memory_space<vmem>>, vector<1x14x16x128xbf16>
    tpu.vector_store %arg8[%c0_71, %c0_72, %c0_73, %c0_74], %103 {strides = array<i32>} : memref<1x14x16x128xbf16, #tpu.memory_space<vmem>>, vector<1x14x16x128xbf16>,
    return
  }
  func.func @transform_0(%arg0: i32) -> (i32, i32, i32) {
    %c0_i32 = arith.constant 0 : i32
    %c0_i32_0 = arith.constant 0 : i32
    %c0_i32_1 = arith.constant 0 : i32
    return %arg0, %c0_i32, %c0_i32_0 : i32, i32, i32
  }
  func.func @transform_1(%arg0: i32) -> (i32, i32) {
    %c0_i32 = arith.constant 0 : i32
    %c0_i32_0 = arith.constant 0 : i32
    %c0_i32_1 = arith.constant 0 : i32
    return %c0_i32, %c0_i32_0 : i32, i32
  }
  func.func @transform_2(%arg0: i32) -> (i32, i32) {
    %c0_i32 = arith.constant 0 : i32
    %c0_i32_0 = arith.constant 0 : i32
    %c0_i32_1 = arith.constant 0 : i32
    return %c0_i32, %c0_i32_0 : i32, i32
  }
  func.func @transform_3(%arg0: i32) -> (i32, i32, i32) {
    %c0_i32 = arith.constant 0 : i32
    %c0_i32_0 = arith.constant 0 : i32
    %c0_i32_1 = arith.constant 0 : i32
    %c0_i32_2 = arith.constant 0 : i32
    return %c0_i32, %c0_i32_0, %c0_i32_1 : i32, i32, i32
  }
  func.func @transform_4(%arg0: i32) -> (i32, i32) {
    %c0_i32 = arith.constant 0 : i32
    %c0_i32_0 = arith.constant 0 : i32
    %c0_i32_1 = arith.constant 0 : i32
    return %c0_i32, %c0_i32_0 : i32, i32
  }
  func.func @transform_5(%arg0: i32) -> (i32, i32) {
    %c0_i32 = arith.constant 0 : i32
    %c0_i32_0 = arith.constant 0 : i32
    %c0_i32_1 = arith.constant 0 : i32
    return %c0_i32, %c0_i32_0 : i32, i32
  }
  func.func @transform_6(%arg0: i32) -> (i32, i32) {
    %c0_i32 = arith.constant 0 : i32
    %c0_i32_0 = arith.constant 0 : i32
    %c0_i32_1 = arith.constant 0 : i32
    return %c0_i32, %c0_i32_0 : i32, i32
  }
  func.func @transform_7(%arg0: i32) -> (i32, i32, i32, i32) {
    %c0_i32 = arith.constant 0 : i32
    %c0_i32_0 = arith.constant 0 : i32
    %c0_i32_1 = arith.constant 0 : i32
    %c0_i32_2 = arith.constant 0 : i32
    return %arg0, %c0_i32, %c0_i32_0, %c0_i32_1 : i32, i32, i32, i32
  }
}

</mosaic_0001>

<llo_original>
// kernel: tpu_custom_call.1
$region0: #{tpu_custom_call.1}
  #allocation0 [shape = 'u32[]', space=smem, size = 0x4, offset = 0x4, fixed_abs, tag = 'smem constant byte address 0x4 - core index']
  #allocation1 [shape = 'u32[144,128]{1,0:T(1,128)}', space=vmem, size = 0x12000, scoped, tag = 'internal scratch']
  #allocation2 [shape = 'f32[16,18,128]{2,1,0:T(8,128)}', space=vmem, size = 0x30000, scoped, tag = 'scratch operand']
  %s0 = inlined_call_operand.vmem [shape: bf16[2,224,32], index: 0, kind: input, shape index: {}]
  %s1 = inlined_call_operand.vmem [shape: bf16[32,128], index: 1, kind: input, shape index: {}]
  %s2 = inlined_call_operand.vmem [shape: f32[1,128], index: 2, kind: input, shape index: {}]
  %s3 = inlined_call_operand.vmem [shape: f32[9,1,128], index: 3, kind: input, shape index: {}]
  %s4 = inlined_call_operand.vmem [shape: f32[1,128], index: 4, kind: input, shape index: {}]
  %s5 = inlined_call_operand.vmem [shape: bf16[128,128], index: 5, kind: input, shape index: {}]
  %s6 = inlined_call_operand.vmem [shape: f32[1,128], index: 6, kind: input, shape index: {}]
  %s7 = inlined_call_operand.hbm [shape: bf16[2,14,16,128], index: 7, kind: output, shape index: {}]
  %s8 = sld [smem:[#allocation0]]
  $region61: #{tpu_custom_call.1} parent=0
    _
  %s10 = ssub.s32 1, %s8
  %s11 = scalar_select 0, %s10, %s8
  $region1: #{tpu_custom_call.1} parent=0
    #allocation3 [shape = 'u8[114688]{0}', space=vmem, size = 0x1c000, scoped, tag = 'output window, operand 0']
    #allocation4 [shape = 's32[2]{0}', space=sflag, size = 0x8, scoped, tag = 'scoped memory for tpu_custom_call.1']
    %12 = vsyncpa [#allocation4], 0
    %s13 = scalar_lea.sflag [#allocation4], 1
    %14 = vsyncpa %s13, 0
    loop: start=0, step=1, limit=4
    $region2: #{tpu_custom_call.1} parent=1 // loop_pre_header
      _
    $region3: #{tpu_custom_call.1} parent=1 // loop_header
      %s16 = sphi 0, %s20
      %p17 = scmp.ge.s32.totalorder %s16, 4
      %s26 = sphi 0, %s28
      %s29 = sphi 0, %s26
      %s30 = sphi 0, %s29
      %s46 = sphi 0, %s30
      %s50 = sphi 0, %s50
      %s52 = sphi 0, %s50
      %s53 = sphi 0, %s52
      %s67 = sphi 0, %s53
      %s71 = sphi 0, %s71
      %s73 = sphi 0, %s71
      %s74 = sphi 0, %s73
      %s88 = sphi 0, %s74
      %s92 = sphi 0, %s92
      %s94 = sphi 0, %s92
      %s95 = sphi 0, %s94
      %s109 = sphi 0, %s95
      %s113 = sphi 0, %s113
      %s115 = sphi 0, %s113
      %s116 = sphi 0, %s115
      %s130 = sphi 0, %s116
      %s134 = sphi 0, %s134
      %s136 = sphi 0, %s134
      %s137 = sphi 0, %s136
      %s151 = sphi 0, %s137
      %s155 = sphi 0, %s155
      %s157 = sphi 0, %s155
      %s158 = sphi 0, %s157
      %s172 = sphi 0, %s158
      %s178 = sphi 0, %s180
      %s181 = sphi 0, %s178
      %s182 = sphi 0, %s181
      %s198 = sphi 0, %s182
    $region4: #{tpu_custom_call.1} parent=1 // loop_header_branch
      %19 = sbr.rel (%p17) target = $region8
    $region5: #{tpu_custom_call.1} parent=1 // loop_body
      %s21 = ssub.s32 %s16, 1
      %s22 = ssub.s32 %s16, 2
      %s23 = sadd.s32 %s16, 1
      %s24 = ssub.s32 %s16, %s23
      %p25 = scmp.eq.s32.totalorder %s24, 0
      %s27 = sadd.s32 %s26, 1
      %s28 = scalar_select %p25, %s26, %s27
      %p31 = pneg %p25
      %p32 = scmp.eq.s32.totalorder %s16, 1
      %p33 = por %p31, %p32
      %p34 = scmp.ne.s32.totalorder %s26, %s29
      %p35 = scmp.eq.s32.totalorder %s16, 0
      %p36 = por %p34, %p35
      %p37 = scmp.ne.s32.totalorder %s26, %s29
      %p38 = scmp.eq.s32.totalorder %s21, 1
      %p39 = por %p37, %p38
      %p40 = scmp.ne.s32.totalorder %s29, %s30
      %p41 = scmp.eq.s32.totalorder %s21, 0
      %p42 = por %p40, %p41
      %p43 = scmp.ne.s32.totalorder %s29, %s30
      %p44 = scmp.eq.s32.totalorder %s22, 1
      %p45 = por %p43, %p44
      %p47 = scmp.ne.s32.totalorder %s30, %s46
      %p48 = scmp.eq.s32.totalorder %s22, 0
      %p49 = por %p47, %p48
      %s51 = sadd.s32 %s50, 1
      %p54 = scmp.eq.s32.totalorder %s16, 1
      %p55 = scmp.ne.s32.totalorder %s50, %s52
      %p56 = scmp.eq.s32.totalorder %s16, 0
      %p57 = por %p55, %p56
      %p58 = scmp.ne.s32.totalorder %s50, %s52
      %p59 = scmp.eq.s32.totalorder %s21, 1
      %p60 = por %p58, %p59
      %p61 = scmp.ne.s32.totalorder %s52, %s53
      %p62 = scmp.eq.s32.totalorder %s21, 0
      %p63 = por %p61, %p62
      %p64 = scmp.ne.s32.totalorder %s52, %s53
      %p65 = scmp.eq.s32.totalorder %s22, 1
      %p66 = por %p64, %p65
      %p68 = scmp.ne.s32.totalorder %s53, %s67
      %p69 = scmp.eq.s32.totalorder %s22, 0
      %p70 = por %p68, %p69
      %s72 = sadd.s32 %s71, 1
      %p75 = scmp.eq.s32.totalorder %s16, 1
      %p76 = scmp.ne.s32.totalorder %s71, %s73
      %p77 = scmp.eq.s32.totalorder %s16, 0
      %p78 = por %p76, %p77
      %p79 = scmp.ne.s32.totalorder %s71, %s73
      %p80 = scmp.eq.s32.totalorder %s21, 1
      %p81 = por %p79, %p80
      %p82 = scmp.ne.s32.totalorder %s73, %s74
      %p83 = scmp.eq.s32.totalorder %s21, 0
      %p84 = por %p82, %p83
      %p85 = scmp.ne.s32.totalorder %s73, %s74
      %p86 = scmp.eq.s32.totalorder %s22, 1
      %p87 = por %p85, %p86
      %p89 = scmp.ne.s32.totalorder %s74, %s88
      %p90 = scmp.eq.s32.totalorder %s22, 0
      %p91 = por %p89, %p90
      %s93 = sadd.s32 %s92, 1
      %p96 = scmp.eq.s32.totalorder %s16, 1
      %p97 = scmp.ne.s32.totalorder %s92, %s94
      %p98 = scmp.eq.s32.totalorder %s16, 0
      %p99 = por %p97, %p98
      %p100 = scmp.ne.s32.totalorder %s92, %s94
      %p101 = scmp.eq.s32.totalorder %s21, 1
      %p102 = por %p100, %p101
      %p103 = scmp.ne.s32.totalorder %s94, %s95
      %p104 = scmp.eq.s32.totalorder %s21, 0
      %p105 = por %p103, %p104
      %p106 = scmp.ne.s32.totalorder %s94, %s95
      %p107 = scmp.eq.s32.totalorder %s22, 1
      %p108 = por %p106, %p107
      %p110 = scmp.ne.s32.totalorder %s95, %s109
      %p111 = scmp.eq.s32.totalorder %s22, 0
      %p112 = por %p110, %p111
      %s114 = sadd.s32 %s113, 1
      %p117 = scmp.eq.s32.totalorder %s16, 1
      %p118 = scmp.ne.s32.totalorder %s113, %s115
      %p119 = scmp.eq.s32.totalorder %s16, 0
      %p120 = por %p118, %p119
      %p121 = scmp.ne.s32.totalorder %s113, %s115
      %p122 = scmp.eq.s32.totalorder %s21, 1
      %p123 = por %p121, %p122
      %p124 = scmp.ne.s32.totalorder %s115, %s116
      %p125 = scmp.eq.s32.totalorder %s21, 0
      %p126 = por %p124, %p125
      %p127 = scmp.ne.s32.totalorder %s115, %s116
      %p128 = scmp.eq.s32.totalorder %s22, 1
      %p129 = por %p127, %p128
      %p131 = scmp.ne.s32.totalorder %s116, %s130
      %p132 = scmp.eq.s32.totalorder %s22, 0
      %p133 = por %p131, %p132
      %s135 = sadd.s32 %s134, 1
      %p138 = scmp.eq.s32.totalorder %s16, 1
      %p139 = scmp.ne.s32.totalorder %s134, %s136
      %p140 = scmp.eq.s32.totalorder %s16, 0
      %p141 = por %p139, %p140
      %p142 = scmp.ne.s32.totalorder %s134, %s136
      %p143 = scmp.eq.s32.totalorder %s21, 1
      %p144 = por %p142, %p143
      %p145 = scmp.ne.s32.totalorder %s136, %s137
      %p146 = scmp.eq.s32.totalorder %s21, 0
      %p147 = por %p145, %p146
      %p148 = scmp.ne.s32.totalorder %s136, %s137
      %p149 = scmp.eq.s32.totalorder %s22, 1
      %p150 = por %p148, %p149
      %p152 = scmp.ne.s32.totalorder %s137, %s151
      %p153 = scmp.eq.s32.totalorder %s22, 0
      %p154 = por %p152, %p153
      %s156 = sadd.s32 %s155, 1
      %p159 = scmp.eq.s32.totalorder %s16, 1
      %p160 = scmp.ne.s32.totalorder %s155, %s157
      %p161 = scmp.eq.s32.totalorder %s16, 0
      %p162 = por %p160, %p161
      %p163 = scmp.ne.s32.totalorder %s155, %s157
      %p164 = scmp.eq.s32.totalorder %s21, 1
      %p165 = por %p163, %p164
      %p166 = scmp.ne.s32.totalorder %s157, %s158
      %p167 = scmp.eq.s32.totalorder %s21, 0
      %p168 = por %p166, %p167
      %p169 = scmp.ne.s32.totalorder %s157, %s158
      %p170 = scmp.eq.s32.totalorder %s22, 1
      %p171 = por %p169, %p170
      %p173 = scmp.ne.s32.totalorder %s158, %s172
      %p174 = scmp.eq.s32.totalorder %s22, 0
      %p175 = por %p173, %p174
      %s176 = ssub.s32 %s16, %s23
      %p177 = scmp.eq.s32.totalorder %s176, 0
      %s179 = sadd.s32 %s178, 1
      %s180 = scalar_select %p177, %s178, %s179
      %p183 = pneg %p177
      %p184 = scmp.eq.s32.totalorder %s16, 1
      %p185 = por %p183, %p184
      %p186 = scmp.ne.s32.totalorder %s178, %s181
      %p187 = scmp.eq.s32.totalorder %s16, 0
      %p188 = por %p186, %p187
      %p189 = scmp.ne.s32.totalorder %s178, %s181
      %p190 = scmp.eq.s32.totalorder %s21, 1
      %p191 = por %p189, %p190
      %p192 = scmp.ne.s32.totalorder %s181, %s182
      %p193 = scmp.eq.s32.totalorder %s21, 0
      %p194 = por %p192, %p193
      %p195 = scmp.ne.s32.totalorder %s181, %s182
      %p196 = scmp.eq.s32.totalorder %s22, 1
      %p197 = por %p195, %p196
      %p199 = scmp.ne.s32.totalorder %s182, %s198
      %p200 = scmp.eq.s32.totalorder %s22, 0
      %p201 = por %p199, %p200
      %p202 = scmp.le.s32.totalorder 1, %s16
      %p203 = scmp.lt.s32.totalorder %s16, 3
      %p204 = pnand %p202, %p203
      %p205 = pneg %p204
      // Predicated region
      $region9: #{tpu_custom_call.1} parent=5 // pred_check
        _
      $region10: #{tpu_custom_call.1} parent=5 // pred_check_branch
        %207 = sbr.rel (%p204) target = $region12
      $region11: #{tpu_custom_call.1} parent=5 // pred_region
        %s208 = ssub.s32 %s16, 1
        // Predicated region
        $region13: #{tpu_custom_call.1} parent=11 // pred_check
          %p209 = pneg %p63
        $region14: #{tpu_custom_call.1} parent=11 // pred_check_branch
          %211 = sbr.rel (%p209) target = $region16
        $region15: #{tpu_custom_call.1} parent=11 // pred_region
          _
        $region16: #{tpu_custom_call.1} parent=11 // pred_fallthru
          _
        // Predicated region
        $region17: #{tpu_custom_call.1} parent=11 // pred_check
          %p212 = pneg %p84
        $region18: #{tpu_custom_call.1} parent=11 // pred_check_branch
          %214 = sbr.rel (%p212) target = $region20
        $region19: #{tpu_custom_call.1} parent=11 // pred_region
          _
        $region20: #{tpu_custom_call.1} parent=11 // pred_fallthru
          _
        // Predicated region
        $region21: #{tpu_custom_call.1} parent=11 // pred_check
          %p215 = pneg %p105
        $region22: #{tpu_custom_call.1} parent=11 // pred_check_branch
          %217 = sbr.rel (%p215) target = $region24
        $region23: #{tpu_custom_call.1} parent=11 // pred_region
          _
        $region24: #{tpu_custom_call.1} parent=11 // pred_fallthru
          _
        // Predicated region
        $region25: #{tpu_custom_call.1} parent=11 // pred_check
          %p218 = pneg %p126
        $region26: #{tpu_custom_call.1} parent=11 // pred_check_branch
          %220 = sbr.rel (%p218) target = $region28
        $region27: #{tpu_custom_call.1} parent=11 // pred_region
          _
        $region28: #{tpu_custom_call.1} parent=11 // pred_fallthru
          _
        // Predicated region
        $region29: #{tpu_custom_call.1} parent=11 // pred_check
          %p221 = pneg %p147
        $region30: #{tpu_custom_call.1} parent=11 // pred_check_branch
          %223 = sbr.rel (%p221) target = $region32
        $region31: #{tpu_custom_call.1} parent=11 // pred_region
          _
        $region32: #{tpu_custom_call.1} parent=11 // pred_fallthru
          _
        // Predicated region
        $region33: #{tpu_custom_call.1} parent=11 // pred_check
          %p224 = pneg %p168
        $region34: #{tpu_custom_call.1} parent=11 // pred_check_branch
          %226 = sbr.rel (%p224) target = $region36
        $region35: #{tpu_custom_call.1} parent=11 // pred_region
          _
        $region36: #{tpu_custom_call.1} parent=11 // pred_fallthru
          _
      $region12: #{tpu_custom_call.1} parent=5 // pred_fallthru
        _
      %p227 = scmp.lt.s32.totalorder %s16, 2
      // Predicated region
      $region37: #{tpu_custom_call.1} parent=5 // pred_check
        %p228 = pneg %p227
      $region38: #{tpu_custom_call.1} parent=5 // pred_check_branch
        %230 = sbr.rel (%p228) target = $region40
      $region39: #{tpu_custom_call.1} parent=5 // pred_region
        // Predicated region
        $region41: #{tpu_custom_call.1} parent=39 // pred_check
          %p231 = pneg %p36
        $region42: #{tpu_custom_call.1} parent=39 // pred_check_branch
          %233 = sbr.rel (%p231) target = $region44
        $region43: #{tpu_custom_call.1} parent=39 // pred_region
          %p234 = scmp.lt.s32.totalorder %s16, 1
          %s235 = scalar_select %p234, %s16, 1
          %s236 = smul.addr %s235, 28
          %s237 = smul.addr %s236, 4
          %s238 = scalar_lea.vmem %s0, %s237
        $region44: #{tpu_custom_call.1} parent=39 // pred_fallthru
          _
      $region40: #{tpu_custom_call.1} parent=5 // pred_fallthru
        _
      %p239 = scmp.le.s32.totalorder 1, %s16
      %p240 = scmp.lt.s32.totalorder %s16, 3
      %p241 = pnand %p239, %p240
      %p242 = pneg %p241
      // Predicated region
      $region45: #{tpu_custom_call.1} parent=5 // pred_check
        _
      $region46: #{tpu_custom_call.1} parent=5 // pred_check_branch
        %244 = sbr.rel (%p241) target = $region48
      $region47: #{tpu_custom_call.1} parent=5 // pred_region
        %s245 = ssub.s32 %s16, 1
        %p246 = scmp.lt.s32.totalorder %s21, 1
        %s247 = scalar_select %p246, %s21, 1
        %s248 = smul.addr %s247, 28
        %s249 = smul.addr %s248, 4
        %s250 = scalar_lea.vmem %s0, %s249
        %p251 = pneg %p42
        %p252 = pneg %p39
        %p253 = pneg %p63
        %p254 = pneg %p60
        %p255 = pneg %p84
        %p256 = pneg %p81
        %p257 = pneg %p105
        %p258 = pneg %p102
        %p259 = pneg %p126
        %p260 = pneg %p123
        %p261 = pneg %p147
        %p262 = pneg %p144
        %p263 = pneg %p168
        %p264 = pneg %p165
        %p265 = pneg %p194
        %p266 = pneg %p191
        %s267 = sand.u32 %s181, 1
        %s268 = scalar_lea.sflag [#allocation4], %s267
        %s269 = sand.u32 %s181, 1
        %s270 = smul.addr %s269, 112
        %s271 = scalar_lea.vmem [#allocation3], %s270
        %p272 = scmp.lt.s32.totalorder %s21, 1
        %s273 = scalar_select %p272, %s21, 1
        %s274 = smul.addr %s273, 28
        %s275 = smul.addr %s274, 4
        %s276 = scalar_lea.vmem %s0, %s275
        %v278 = vlaneseq
        %v279 = vshrl.u32 %v278, 7
        %v280 = vadd.s32 %v279, 8
        %vm281 = vcmp.lt.s32.totalorder %v279, 14
        %vm282 = vcmp.lt.s32.totalorder %v280, 14
        %v283 = vld [vmem:[%s276] sm:$0xf]
        %v284 = vld [vmem:[%s276 + $0x4] sm:$0xf]
        %v285 = vld [vmem:[%s276 + $0x8] sm:$0xf]
        %v286 = vld [vmem:[%s276 + $0xc] sm:$0xf]
        %v287 = vld [vmem:[%s276 + $0x10] sm:$0xf]
        %v288 = vld [vmem:[%s276 + $0x14] sm:$0xf]
        %v289 = vld [vmem:[%s276 + $0x18] sm:$0xf]
        %v290 = vld [vmem:[%s276 + $0x1c] sm:$0xf]
        %v291 = vld [vmem:[%s276 + $0x20] sm:$0xf]
        %v292 = vld [vmem:[%s276 + $0x24] sm:$0xf]
        %v293 = vld [vmem:[%s276 + $0x28] sm:$0xf]
        %v294 = vld [vmem:[%s276 + $0x2c] sm:$0xf]
        %v295 = vld [vmem:[%s276 + $0x30] sm:$0xf]
        %v296 = vld [vmem:[%s276 + $0x34] sm:$0xf]
        %v297 = vld [vmem:[%s276 + $0x38] sm:$0xf]
        %v298 = vld [vmem:[%s276 + $0x3c] sm:$0xf]
        %v299 = vld [vmem:[%s276 + $0x40] sm:$0xf]
        %v300 = vld [vmem:[%s276 + $0x44] sm:$0xf]
        %v301 = vld [vmem:[%s276 + $0x48] sm:$0xf]
        %v302 = vld [vmem:[%s276 + $0x4c] sm:$0xf]
        %v303 = vld [vmem:[%s276 + $0x50] sm:$0xf]
        %v304 = vld [vmem:[%s276 + $0x54] sm:$0xf]
        %v305 = vld [vmem:[%s276 + $0x58] sm:$0xf]
        %v306 = vld [vmem:[%s276 + $0x5c] sm:$0xf]
        %v307 = vld [vmem:[%s276 + $0x60] sm:$0xf]
        %v308 = vld [vmem:[%s276 + $0x64] sm:$0xf]
        %v309 = vld [vmem:[%s276 + $0x68] sm:$0xf]
        %v310 = vld [vmem:[%s276 + $0x6c] sm:$0xf]
        %v311 = vld [vmem:[%s1] sm:$0xf]
        %v312 = vld [vmem:[%s1 + $0x4] sm:$0xf]
        %v313 = vld [vmem:[%s1 + $0x8] sm:$0xf]
        %v314 = vld [vmem:[%s1 + $0xc] sm:$0xf]
        %v315 = vld [vmem:[%s2] sm:$0x1]
        %v317 = vlaneseq
        %v318 = vshrl.u32 %v317, 7
        %v319 = vsub.s32 0, %v318
        %v320 = vrot.slane %v315, %v319
        %v350 = vunpack.c.l.b16 %v283
        %v351 = vunpack.c.l.b16 %v284
        %v352 = vunpack.c.l.b16 %v285
        %v353 = vunpack.c.l.b16 %v286
        %v354 = vunpack.c.l.b16 %v287
        %v355 = vunpack.c.l.b16 %v288
        %v356 = vunpack.c.l.b16 %v289
        %v357 = vunpack.c.l.b16 %v290
        %v358 = vunpack.c.l.b16 %v291
        %v359 = vunpack.c.l.b16 %v292
        %v360 = vunpack.c.l.b16 %v293
        %v361 = vunpack.c.l.b16 %v294
        %v362 = vunpack.c.l.b16 %v295
        %v363 = vunpack.c.l.b16 %v296
        %v364 = vunpack.c.l.b16 %v297
        %v365 = vunpack.c.l.b16 %v298
        %v366 = vunpack.c.l.b16 %v299
        %v367 = vunpack.c.l.b16 %v300
        %v368 = vunpack.c.l.b16 %v301
        %v369 = vunpack.c.l.b16 %v302
        %v370 = vunpack.c.l.b16 %v303
        %v371 = vunpack.c.l.b16 %v304
        %v372 = vunpack.c.l.b16 %v305
        %v373 = vunpack.c.l.b16 %v306
        %v374 = vunpack.c.l.b16 %v307
        %v375 = vunpack.c.l.b16 %v308
        %v376 = vunpack.c.l.b16 %v309
        %v377 = vunpack.c.l.b16 %v310
        %v378 = vpack.c.b16 %v351, %v350
        %v379 = vpack.c.b16 %v353, %v352
        %v380 = vpack.c.b16 %v355, %v354
        %v381 = vpack.c.b16 %v357, %v356
        %v382 = vpack.c.b16 %v359, %v358
        %v383 = vpack.c.b16 %v361, %v360
        %v384 = vpack.c.b16 %v363, %v362
        %v385 = vpack.c.b16 %v365, %v364
        %v386 = vpack.c.b16 %v367, %v366
        %v387 = vpack.c.b16 %v369, %v368
        %v388 = vpack.c.b16 %v371, %v370
        %v389 = vpack.c.b16 %v373, %v372
        %v390 = vpack.c.b16 %v375, %v374
        %v391 = vpack.c.b16 %v377, %v376
        %v396 = vunpack.c.l.b16 %v311
        %v397 = vunpack.c.l.b16 %v312
        %v398 = vunpack.c.l.b16 %v313
        %v399 = vunpack.c.l.b16 %v314
        %v400 = vpack.c.b16 %v397, %v396
        %v401 = vpack.c.b16 %v399, %v398
        %vm404 = vcmask 261120
        %v406 = vsel %vm404, %v378, 0
        %v409 = vsel %vm404, %v379, 0
        %v412 = vsel %vm404, %v380, 0
        %v415 = vsel %vm404, %v381, 0
        %v418 = vsel %vm404, %v382, 0
        %v421 = vsel %vm404, %v383, 0
        %v424 = vsel %vm404, %v384, 0
        %v427 = vsel %vm404, %v385, 0
        %v430 = vsel %vm404, %v386, 0
        %v433 = vsel %vm404, %v387, 0
        %v436 = vsel %vm404, %v388, 0
        %v439 = vsel %vm404, %v389, 0
        %v442 = vsel %vm404, %v390, 0
        %v445 = vsel %vm404, %v391, 0
        %447 = vmatprep.subr.bf16.mxu0 0
        %448 = vmatpush1.bf16.msra.mxu0 %v400
        %449 = vmatprep.subr.bf16.mxu0 0
        %450 = vmatpush1.bf16.msra.mxu0 %v401
        %451 = vmatprep.subr.bf16.mxu0 0
        %452 = vmatpush1.bf16.msra.mxu0 0
        %453 = vmatprep.subr.bf16.mxu0 0
        %454 = vmatpush1.bf16.msra.mxu0 0
        %455 = vmatprep.subr.bf16.mxu0 0
        %456 = vmatpush1.bf16.msra.mxu0 0
        %457 = vmatprep.subr.bf16.mxu0 0
        %458 = vmatpush1.bf16.msra.mxu0 0
        %459 = vmatprep.subr.bf16.mxu0 0
        %460 = vmatpush1.bf16.msra.mxu0 0
        %461 = vmatprep.subr.bf16.mxu0 0
        %462 = vmatpush1.bf16.msra.mxu0 0
        %463 = vmatprep.subr.bf16.mxu0 0
        %464 = vmatpush1.bf16.msra.mxu0 0
        %465 = vmatprep.subr.bf16.mxu0 0
        %466 = vmatpush1.bf16.msra.mxu0 0
        %467 = vmatprep.subr.bf16.mxu0 0
        %468 = vmatpush1.bf16.msra.mxu0 0
        %469 = vmatprep.subr.bf16.mxu0 0
        %470 = vmatpush1.bf16.msra.mxu0 0
        %471 = vmatprep.subr.bf16.mxu0 0
        %472 = vmatpush1.bf16.msra.mxu0 0
        %473 = vmatprep.subr.bf16.mxu0 0
        %474 = vmatpush1.bf16.msra.mxu0 0
        %475 = vmatprep.subr.bf16.mxu0 0
        %476 = vmatpush1.bf16.msra.mxu0 0
        %477 = vmatprep.subr.bf16.mxu0 0
        %478 = vmatpush1.bf16.msra.mxu0 0
        %479 = vmatprep.mubr.bf16.mxu0 0
        %480 = vmatmul.mubr.bf16.gmra.mrb[0].mxu0 %v406
        %v481 = vpop.f32.mrb[0].mxu0
        %v482 = vadd.f32 %v320, %v481
        %v483 = vpop.f32.mrb[0].mxu0
        %v484 = vpop.f32.mrb[0].mxu0
        %v485 = vadd.f32 %v320, %v484
        %v486 = vpop.f32.mrb[0].mxu0
        %487 = vmatprep.mubr.bf16.mxu0 0
        %488 = vmatmul.mubr.bf16.gmra.mrb[0].mxu0 %v409
        %v489 = vpop.f32.mrb[0].mxu0
        %v490 = vadd.f32 %v320, %v489
        %v491 = vpop.f32.mrb[0].mxu0
        %v492 = vpop.f32.mrb[0].mxu0
        %v493 = vadd.f32 %v320, %v492
        %v494 = vpop.f32.mrb[0].mxu0
        %495 = vmatprep.mubr.bf16.mxu0 0
        %496 = vmatmul.mubr.bf16.gmra.mrb[0].mxu0 %v412
        %v497 = vpop.f32.mrb[0].mxu0
        %v498 = vadd.f32 %v320, %v497
        %v499 = vpop.f32.mrb[0].mxu0
        %v500 = vpop.f32.mrb[0].mxu0
        %v501 = vadd.f32 %v320, %v500
        %v502 = vpop.f32.mrb[0].mxu0
        %503 = vmatprep.mubr.bf16.mxu0 0
        %504 = vmatmul.mubr.bf16.gmra.mrb[0].mxu0 %v415
        %v505 = vpop.f32.mrb[0].mxu0
        %v506 = vadd.f32 %v320, %v505
        %v507 = vpop.f32.mrb[0].mxu0
        %v508 = vpop.f32.mrb[0].mxu0
        %v509 = vadd.f32 %v320, %v508
        %v510 = vpop.f32.mrb[0].mxu0
        %511 = vmatprep.mubr.bf16.mxu0 0
        %512 = vmatmul.mubr.bf16.gmra.mrb[0].mxu0 %v418
        %v513 = vpop.f32.mrb[0].mxu0
        %v514 = vadd.f32 %v320, %v513
        %v515 = vpop.f32.mrb[0].mxu0
        %v516 = vpop.f32.mrb[0].mxu0
        %v517 = vadd.f32 %v320, %v516
        %v518 = vpop.f32.mrb[0].mxu0
        %519 = vmatprep.mubr.bf16.mxu0 0
        %520 = vmatmul.mubr.bf16.gmra.mrb[0].mxu0 %v421
        %v521 = vpop.f32.mrb[0].mxu0
        %v522 = vadd.f32 %v320, %v521
        %v523 = vpop.f32.mrb[0].mxu0
        %v524 = vpop.f32.mrb[0].mxu0
        %v525 = vadd.f32 %v320, %v524
        %v526 = vpop.f32.mrb[0].mxu0
        %527 = vmatprep.mubr.bf16.mxu0 0
        %528 = vmatmul.mubr.bf16.gmra.mrb[0].mxu0 %v424
        %v529 = vpop.f32.mrb[0].mxu0
        %v530 = vadd.f32 %v320, %v529
        %v531 = vpop.f32.mrb[0].mxu0
        %v532 = vpop.f32.mrb[0].mxu0
        %v533 = vadd.f32 %v320, %v532
        %v534 = vpop.f32.mrb[0].mxu0
        %535 = vmatprep.mubr.bf16.mxu0 0
        %536 = vmatmul.mubr.bf16.gmra.mrb[0].mxu0 %v427
        %v537 = vpop.f32.mrb[0].mxu0
        %v538 = vadd.f32 %v320, %v537
        %v539 = vpop.f32.mrb[0].mxu0
        %v540 = vpop.f32.mrb[0].mxu0
        %v541 = vadd.f32 %v320, %v540
        %v542 = vpop.f32.mrb[0].mxu0
        %543 = vmatprep.mubr.bf16.mxu0 0
        %544 = vmatmul.mubr.bf16.gmra.mrb[0].mxu0 %v430
        %v545 = vpop.f32.mrb[0].mxu0
        %v546 = vadd.f32 %v320, %v545
        %v547 = vpop.f32.mrb[0].mxu0
        %v548 = vpop.f32.mrb[0].mxu0
        %v549 = vadd.f32 %v320, %v548
        %v550 = vpop.f32.mrb[0].mxu0
        %551 = vmatprep.mubr.bf16.mxu0 0
        %552 = vmatmul.mubr.bf16.gmra.mrb[0].mxu0 %v433
        %v553 = vpop.f32.mrb[0].mxu0
        %v554 = vadd.f32 %v320, %v553
        %v555 = vpop.f32.mrb[0].mxu0
        %v556 = vpop.f32.mrb[0].mxu0
        %v557 = vadd.f32 %v320, %v556
        %v558 = vpop.f32.mrb[0].mxu0
        %559 = vmatprep.mubr.bf16.mxu0 0
        %560 = vmatmul.mubr.bf16.gmra.mrb[0].mxu0 %v436
        %v561 = vpop.f32.mrb[0].mxu0
        %v562 = vadd.f32 %v320, %v561
        %v563 = vpop.f32.mrb[0].mxu0
        %v564 = vpop.f32.mrb[0].mxu0
        %v565 = vadd.f32 %v320, %v564
        %v566 = vpop.f32.mrb[0].mxu0
        %567 = vmatprep.mubr.bf16.mxu0 0
        %568 = vmatmul.mubr.bf16.gmra.mrb[0].mxu0 %v439
        %v569 = vpop.f32.mrb[0].mxu0
        %v570 = vadd.f32 %v320, %v569
        %v571 = vpop.f32.mrb[0].mxu0
        %v572 = vpop.f32.mrb[0].mxu0
        %v573 = vadd.f32 %v320, %v572
        %v574 = vpop.f32.mrb[0].mxu0
        %575 = vmatprep.mubr.bf16.mxu0 0
        %576 = vmatmul.mubr.bf16.gmra.mrb[0].mxu0 %v442
        %v577 = vpop.f32.mrb[0].mxu0
        %v578 = vadd.f32 %v320, %v577
        %v579 = vpop.f32.mrb[0].mxu0
        %v580 = vpop.f32.mrb[0].mxu0
        %v581 = vadd.f32 %v320, %v580
        %v582 = vpop.f32.mrb[0].mxu0
        %583 = vmatprep.mubr.bf16.mxu0 0
        %584 = vmatmul.mubr.bf16.gmra.mrb[0].mxu0 %v445
        %v585 = vpop.f32.mrb[0].mxu0
        %v586 = vadd.f32 %v320, %v585
        %v587 = vpop.f32.mrb[0].mxu0
        %v588 = vpop.f32.mrb[0].mxu0
        %v589 = vadd.f32 %v320, %v588
        %v590 = vpop.f32.mrb[0].mxu0
        %591 = vdwg.mxu0
        %v592 = vmax.f32 %v482, 0.0
        %v593 = vmax.f32 %v485, 0.0
        %v594 = vmax.f32 %v490, 0.0
        %v595 = vmax.f32 %v493, 0.0
        %v596 = vmax.f32 %v498, 0.0
        %v597 = vmax.f32 %v501, 0.0
        %v598 = vmax.f32 %v506, 0.0
        %v599 = vmax.f32 %v509, 0.0
        %v600 = vmax.f32 %v514, 0.0
        %v601 = vmax.f32 %v517, 0.0
        %v602 = vmax.f32 %v522, 0.0
        %v603 = vmax.f32 %v525, 0.0
        %v604 = vmax.f32 %v530, 0.0
        %v605 = vmax.f32 %v533, 0.0
        %v606 = vmax.f32 %v538, 0.0
        %v607 = vmax.f32 %v541, 0.0
        %v608 = vmax.f32 %v546, 0.0
        %v609 = vmax.f32 %v549, 0.0
        %v610 = vmax.f32 %v554, 0.0
        %v611 = vmax.f32 %v557, 0.0
        %v612 = vmax.f32 %v562, 0.0
        %v613 = vmax.f32 %v565, 0.0
        %v614 = vmax.f32 %v570, 0.0
        %v615 = vmax.f32 %v573, 0.0
        %v616 = vmax.f32 %v578, 0.0
        %v617 = vmax.f32 %v581, 0.0
        %v618 = vmax.f32 %v586, 0.0
        %v619 = vmax.f32 %v589, 0.0
        %v620 = vsel %vm281, 1, 0
        %v621 = vsel %vm282, 1, 0
        %vm622 = vcmp.eq.s32.totalorder %v620, 1
        %vm623 = vcmp.eq.s32.totalorder %v621, 1
        %v624 = vsel %vm622, %v592, 0.0
        %v625 = vsel %vm623, %v593, 0.0
        %v626 = vsel %vm622, %v594, 0.0
        %v627 = vsel %vm623, %v595, 0.0
        %v628 = vsel %vm622, %v596, 0.0
        %v629 = vsel %vm623, %v597, 0.0
        %v630 = vsel %vm622, %v598, 0.0
        %v631 = vsel %vm623, %v599, 0.0
        %v632 = vsel %vm622, %v600, 0.0
        %v633 = vsel %vm623, %v601, 0.0
        %v634 = vsel %vm622, %v602, 0.0
        %v635 = vsel %vm623, %v603, 0.0
        %v636 = vsel %vm622, %v604, 0.0
        %v637 = vsel %vm623, %v605, 0.0
        %v638 = vsel %vm622, %v606, 0.0
        %v639 = vsel %vm623, %v607, 0.0
        %v640 = vsel %vm622, %v608, 0.0
        %v641 = vsel %vm623, %v609, 0.0
        %v642 = vsel %vm622, %v610, 0.0
        %v643 = vsel %vm623, %v611, 0.0
        %v644 = vsel %vm622, %v612, 0.0
        %v645 = vsel %vm623, %v613, 0.0
        %v646 = vsel %vm622, %v614, 0.0
        %v647 = vsel %vm623, %v615, 0.0
        %v648 = vsel %vm622, %v616, 0.0
        %v649 = vsel %vm623, %v617, 0.0
        %v650 = vsel %vm622, %v618, 0.0
        %v651 = vsel %vm623, %v619, 0.0
        %652 = vst [vmem:[#allocation2] sm:$0xff] 0.0
        %653 = vst [vmem:[#allocation2 + $0x8] sm:$0xff] 0.0
        %654 = vst [vmem:[#allocation2 + $0x10] sm:$0x3] 0.0
        %655 = vst [vmem:[#allocation2 + $0x18] sm:$0xff] 0.0
        %656 = vst [vmem:[#allocation2 + $0x20] sm:$0xff] 0.0
        %657 = vst [vmem:[#allocation2 + $0x28] sm:$0x3] 0.0
        %658 = vst [vmem:[#allocation2 + $0x30] sm:$0xff] 0.0
        %659 = vst [vmem:[#allocation2 + $0x38] sm:$0xff] 0.0
        %660 = vst [vmem:[#allocation2 + $0x40] sm:$0x3] 0.0
        %661 = vst [vmem:[#allocation2 + $0x48] sm:$0xff] 0.0
        %662 = vst [vmem:[#allocation2 + $0x50] sm:$0xff] 0.0
        %663 = vst [vmem:[#allocation2 + $0x58] sm:$0x3] 0.0
        %664 = vst [vmem:[#allocation2 + $0x60] sm:$0xff] 0.0
        %665 = vst [vmem:[#allocation2 + $0x68] sm:$0xff] 0.0
        %666 = vst [vmem:[#allocation2 + $0x70] sm:$0x3] 0.0
        %667 = vst [vmem:[#allocation2 + $0x78] sm:$0xff] 0.0
        %668 = vst [vmem:[#allocation2 + $0x80] sm:$0xff] 0.0
        %669 = vst [vmem:[#allocation2 + $0x88] sm:$0x3] 0.0
        %670 = vst [vmem:[#allocation2 + $0x90] sm:$0xff] 0.0
        %671 = vst [vmem:[#allocation2 + $0x98] sm:$0xff] 0.0
        %672 = vst [vmem:[#allocation2 + $0xa0] sm:$0x3] 0.0
        %673 = vst [vmem:[#allocation2 + $0xa8] sm:$0xff] 0.0
        %674 = vst [vmem:[#allocation2 + $0xb0] sm:$0xff] 0.0
        %675 = vst [vmem:[#allocation2 + $0xb8] sm:$0x3] 0.0
        %676 = vst [vmem:[#allocation2 + $0xc0] sm:$0xff] 0.0
        %677 = vst [vmem:[#allocation2 + $0xc8] sm:$0xff] 0.0
        %678 = vst [vmem:[#allocation2 + $0xd0] sm:$0x3] 0.0
        %679 = vst [vmem:[#allocation2 + $0xd8] sm:$0xff] 0.0
        %680 = vst [vmem:[#allocation2 + $0xe0] sm:$0xff] 0.0
        %681 = vst [vmem:[#allocation2 + $0xe8] sm:$0x3] 0.0
        %682 = vst [vmem:[#allocation2 + $0xf0] sm:$0xff] 0.0
        %683 = vst [vmem:[#allocation2 + $0xf8] sm:$0xff] 0.0
        %684 = vst [vmem:[#allocation2 + $0x100] sm:$0x3] 0.0
        %685 = vst [vmem:[#allocation2 + $0x108] sm:$0xff] 0.0
        %686 = vst [vmem:[#allocation2 + $0x110] sm:$0xff] 0.0
        %687 = vst [vmem:[#allocation2 + $0x118] sm:$0x3] 0.0
        %688 = vst [vmem:[#allocation2 + $0x120] sm:$0xff] 0.0
        %689 = vst [vmem:[#allocation2 + $0x128] sm:$0xff] 0.0
        %690 = vst [vmem:[#allocation2 + $0x130] sm:$0x3] 0.0
        %691 = vst [vmem:[#allocation2 + $0x138] sm:$0xff] 0.0
        %692 = vst [vmem:[#allocation2 + $0x140] sm:$0xff] 0.0
        %693 = vst [vmem:[#allocation2 + $0x148] sm:$0x3] 0.0
        %694 = vst [vmem:[#allocation2 + $0x150] sm:$0xff] 0.0
        %695 = vst [vmem:[#allocation2 + $0x158] sm:$0xff] 0.0
        %696 = vst [vmem:[#allocation2 + $0x160] sm:$0x3] 0.0
        %697 = vst [vmem:[#allocation2 + $0x168] sm:$0xff] 0.0
        %698 = vst [vmem:[#allocation2 + $0x170] sm:$0xff] 0.0
        %699 = vst [vmem:[#allocation2 + $0x178] sm:$0x3] 0.0
        %s700 = scalar_lea.vmem [#allocation2], 24
        %701 = vst [vmem:[%s700 + $0x1] sm:$0xff] %v624
        %702 = vst [vmem:[%s700 + $0x9] sm:$0xff] %v625
        %703 = vst [vmem:[%s700 + $0x19] sm:$0xff] %v626
        %704 = vst [vmem:[%s700 + $0x21] sm:$0xff] %v627
        %705 = vst [vmem:[%s700 + $0x31] sm:$0xff] %v628
        %706 = vst [vmem:[%s700 + $0x39] sm:$0xff] %v629
        %707 = vst [vmem:[%s700 + $0x49] sm:$0xff] %v630
        %708 = vst [vmem:[%s700 + $0x51] sm:$0xff] %v631
        %709 = vst [vmem:[%s700 + $0x61] sm:$0xff] %v632
        %710 = vst [vmem:[%s700 + $0x69] sm:$0xff] %v633
        %711 = vst [vmem:[%s700 + $0x79] sm:$0xff] %v634
        %712 = vst [vmem:[%s700 + $0x81] sm:$0xff] %v635
        %713 = vst [vmem:[%s700 + $0x91] sm:$0xff] %v636
        %714 = vst [vmem:[%s700 + $0x99] sm:$0xff] %v637
        %715 = vst [vmem:[%s700 + $0xa9] sm:$0xff] %v638
        %716 = vst [vmem:[%s700 + $0xb1] sm:$0xff] %v639
        %717 = vst [vmem:[%s700 + $0xc1] sm:$0xff] %v640
        %718 = vst [vmem:[%s700 + $0xc9] sm:$0xff] %v641
        %719 = vst [vmem:[%s700 + $0xd9] sm:$0xff] %v642
        %720 = vst [vmem:[%s700 + $0xe1] sm:$0xff] %v643
        %721 = vst [vmem:[%s700 + $0xf1] sm:$0xff] %v644
        %722 = vst [vmem:[%s700 + $0xf9] sm:$0xff] %v645
        %723 = vst [vmem:[%s700 + $0x109] sm:$0xff] %v646
        %724 = vst [vmem:[%s700 + $0x111] sm:$0xff] %v647
        %725 = vst [vmem:[%s700 + $0x121] sm:$0xff] %v648
        %726 = vst [vmem:[%s700 + $0x129] sm:$0xff] %v649
        %727 = vst [vmem:[%s700 + $0x139] sm:$0xff] %v650
        %728 = vst [vmem:[%s700 + $0x141] sm:$0xff] %v651
        %v729 = vld [vmem:[#allocation2] sm:$0xff]
        %v730 = vld [vmem:[#allocation2 + $0x8] sm:$0xff]
        %v731 = vld [vmem:[#allocation2 + $0x18] sm:$0xff]
        %v732 = vld [vmem:[#allocation2 + $0x20] sm:$0xff]
        %v733 = vld [vmem:[#allocation2 + $0x30] sm:$0xff]
        %v734 = vld [vmem:[#allocation2 + $0x38] sm:$0xff]
        %v735 = vld [vmem:[#allocation2 + $0x48] sm:$0xff]
        %v736 = vld [vmem:[#allocation2 + $0x50] sm:$0xff]
        %v737 = vld [vmem:[#allocation2 + $0x60] sm:$0xff]
        %v738 = vld [vmem:[#allocation2 + $0x68] sm:$0xff]
        %v739 = vld [vmem:[#allocation2 + $0x78] sm:$0xff]
        %v740 = vld [vmem:[#allocation2 + $0x80] sm:$0xff]
        %v741 = vld [vmem:[#allocation2 + $0x90] sm:$0xff]
        %v742 = vld [vmem:[#allocation2 + $0x98] sm:$0xff]
        %v743 = vld [vmem:[#allocation2 + $0xa8] sm:$0xff]
        %v744 = vld [vmem:[#allocation2 + $0xb0] sm:$0xff]
        %v745 = vld [vmem:[#allocation2 + $0xc0] sm:$0xff]
        %v746 = vld [vmem:[#allocation2 + $0xc8] sm:$0xff]
        %v747 = vld [vmem:[#allocation2 + $0xd8] sm:$0xff]
        %v748 = vld [vmem:[#allocation2 + $0xe0] sm:$0xff]
        %v749 = vld [vmem:[#allocation2 + $0xf0] sm:$0xff]
        %v750 = vld [vmem:[#allocation2 + $0xf8] sm:$0xff]
        %v751 = vld [vmem:[#allocation2 + $0x108] sm:$0xff]
        %v752 = vld [vmem:[#allocation2 + $0x110] sm:$0xff]
        %v753 = vld [vmem:[#allocation2 + $0x120] sm:$0xff]
        %v754 = vld [vmem:[#allocation2 + $0x128] sm:$0xff]
        %v755 = vld [vmem:[#allocation2 + $0x138] sm:$0xff]
        %v756 = vld [vmem:[#allocation2 + $0x140] sm:$0xff]
        %v757 = vld [vmem:[%s3] sm:$0x1]
        %v759 = vlaneseq
        %v760 = vshrl.u32 %v759, 7
        %v761 = vsub.s32 0, %v760
        %v762 = vrot.slane %v757, %v761
        %v764 = vmul.f32 %v729, %v762
        %v765 = vmul.f32 %v730, %v762
        %v766 = vmul.f32 %v731, %v762
        %v767 = vmul.f32 %v732, %v762
        %v768 = vmul.f32 %v733, %v762
        %v769 = vmul.f32 %v734, %v762
        %v770 = vmul.f32 %v735, %v762
        %v771 = vmul.f32 %v736, %v762
        %v772 = vmul.f32 %v737, %v762
        %v773 = vmul.f32 %v738, %v762
        %v774 = vmul.f32 %v739, %v762
        %v775 = vmul.f32 %v740, %v762
        %v776 = vmul.f32 %v741, %v762
        %v777 = vmul.f32 %v742, %v762
        %v778 = vmul.f32 %v743, %v762
        %v779 = vmul.f32 %v744, %v762
        %v780 = vmul.f32 %v745, %v762
        %v781 = vmul.f32 %v746, %v762
        %v782 = vmul.f32 %v747, %v762
        %v783 = vmul.f32 %v748, %v762
        %v784 = vmul.f32 %v749, %v762
        %v785 = vmul.f32 %v750, %v762
        %v786 = vmul.f32 %v751, %v762
        %v787 = vmul.f32 %v752, %v762
        %v788 = vmul.f32 %v753, %v762
        %v789 = vmul.f32 %v754, %v762
        %v790 = vmul.f32 %v755, %v762
        %v791 = vmul.f32 %v756, %v762
        %v792 = vld [vmem:[#allocation2 + $0x1] sm:$0xff]
        %v793 = vld [vmem:[#allocation2 + $0x9] sm:$0xff]
        %v794 = vld [vmem:[#allocation2 + $0x19] sm:$0xff]
        %v795 = vld [vmem:[#allocation2 + $0x21] sm:$0xff]
        %v796 = vld [vmem:[#allocation2 + $0x31] sm:$0xff]
        %v797 = vld [vmem:[#allocation2 + $0x39] sm:$0xff]
        %v798 = vld [vmem:[#allocation2 + $0x49] sm:$0xff]
        %v799 = vld [vmem:[#allocation2 + $0x51] sm:$0xff]
        %v800 = vld [vmem:[#allocation2 + $0x61] sm:$0xff]
        %v801 = vld [vmem:[#allocation2 + $0x69] sm:$0xff]
        %v802 = vld [vmem:[#allocation2 + $0x79] sm:$0xff]
        %v803 = vld [vmem:[#allocation2 + $0x81] sm:$0xff]
        %v804 = vld [vmem:[#allocation2 + $0x91] sm:$0xff]
        %v805 = vld [vmem:[#allocation2 + $0x99] sm:$0xff]
        %v806 = vld [vmem:[#allocation2 + $0xa9] sm:$0xff]
        %v807 = vld [vmem:[#allocation2 + $0xb1] sm:$0xff]
        %v808 = vld [vmem:[#allocation2 + $0xc1] sm:$0xff]
        %v809 = vld [vmem:[#allocation2 + $0xc9] sm:$0xff]
        %v810 = vld [vmem:[#allocation2 + $0xd9] sm:$0xff]
        %v811 = vld [vmem:[#allocation2 + $0xe1] sm:$0xff]
        %v812 = vld [vmem:[#allocation2 + $0xf1] sm:$0xff]
        %v813 = vld [vmem:[#allocation2 + $0xf9] sm:$0xff]
        %v814 = vld [vmem:[#allocation2 + $0x109] sm:$0xff]
        %v815 = vld [vmem:[#allocation2 + $0x111] sm:$0xff]
        %v816 = vld [vmem:[#allocation2 + $0x121] sm:$0xff]
        %v817 = vld [vmem:[#allocation2 + $0x129] sm:$0xff]
        %v818 = vld [vmem:[#allocation2 + $0x139] sm:$0xff]
        %v819 = vld [vmem:[#allocation2 + $0x141] sm:$0xff]
        %s820 = scalar_lea.vmem %s3, 1
        %v821 = vld [vmem:[%s820] sm:$0x1]
        %v823 = vlaneseq
        %v824 = vshrl.u32 %v823, 7
        %v825 = vsub.s32 0, %v824
        %v826 = vrot.slane %v821, %v825
        %v828 = vmul.f32 %v792, %v826
        %v829 = vmul.f32 %v793, %v826
        %v830 = vmul.f32 %v794, %v826
        %v831 = vmul.f32 %v795, %v826
        %v832 = vmul.f32 %v796, %v826
        %v833 = vmul.f32 %v797, %v826
        %v834 = vmul.f32 %v798, %v826
        %v835 = vmul.f32 %v799, %v826
        %v836 = vmul.f32 %v800, %v826
        %v837 = vmul.f32 %v801, %v826
        %v838 = vmul.f32 %v802, %v826
        %v839 = vmul.f32 %v803, %v826
        %v840 = vmul.f32 %v804, %v826
        %v841 = vmul.f32 %v805, %v826
        %v842 = vmul.f32 %v806, %v826
        %v843 = vmul.f32 %v807, %v826
        %v844 = vmul.f32 %v808, %v826
        %v845 = vmul.f32 %v809, %v826
        %v846 = vmul.f32 %v810, %v826
        %v847 = vmul.f32 %v811, %v826
        %v848 = vmul.f32 %v812, %v826
        %v849 = vmul.f32 %v813, %v826
        %v850 = vmul.f32 %v814, %v826
        %v851 = vmul.f32 %v815, %v826
        %v852 = vmul.f32 %v816, %v826
        %v853 = vmul.f32 %v817, %v826
        %v854 = vmul.f32 %v818, %v826
        %v855 = vmul.f32 %v819, %v826
        %v856 = vadd.f32 %v764, %v828
        %v857 = vadd.f32 %v765, %v829
        %v858 = vadd.f32 %v766, %v830
        %v859 = vadd.f32 %v767, %v831
        %v860 = vadd.f32 %v768, %v832
        %v861 = vadd.f32 %v769, %v833
        %v862 = vadd.f32 %v770, %v834
        %v863 = vadd.f32 %v771, %v835
        %v864 = vadd.f32 %v772, %v836
        %v865 = vadd.f32 %v773, %v837
        %v866 = vadd.f32 %v774, %v838
        %v867 = vadd.f32 %v775, %v839
        %v868 = vadd.f32 %v776, %v840
        %v869 = vadd.f32 %v777, %v841
        %v870 = vadd.f32 %v778, %v842
        %v871 = vadd.f32 %v779, %v843
        %v872 = vadd.f32 %v780, %v844
        %v873 = vadd.f32 %v781, %v845
        %v874 = vadd.f32 %v782, %v846
        %v875 = vadd.f32 %v783, %v847
        %v876 = vadd.f32 %v784, %v848
        %v877 = vadd.f32 %v785, %v849
        %v878 = vadd.f32 %v786, %v850
        %v879 = vadd.f32 %v787, %v851
        %v880 = vadd.f32 %v788, %v852
        %v881 = vadd.f32 %v789, %v853
        %v882 = vadd.f32 %v790, %v854
        %v883 = vadd.f32 %v791, %v855
        %v884 = vld [vmem:[#allocation2 + $0x2] sm:$0xff]
        %v885 = vld [vmem:[#allocation2 + $0xa] sm:$0xff]
        %v886 = vld [vmem:[#allocation2 + $0x1a] sm:$0xff]
        %v887 = vld [vmem:[#allocation2 + $0x22] sm:$0xff]
        %v888 = vld [vmem:[#allocation2 + $0x32] sm:$0xff]
        %v889 = vld [vmem:[#allocation2 + $0x3a] sm:$0xff]
        %v890 = vld [vmem:[#allocation2 + $0x4a] sm:$0xff]
        %v891 = vld [vmem:[#allocation2 + $0x52] sm:$0xff]
        %v892 = vld [vmem:[#allocation2 + $0x62] sm:$0xff]
        %v893 = vld [vmem:[#allocation2 + $0x6a] sm:$0xff]
        %v894 = vld [vmem:[#allocation2 + $0x7a] sm:$0xff]
        %v895 = vld [vmem:[#allocation2 + $0x82] sm:$0xff]
        %v896 = vld [vmem:[#allocation2 + $0x92] sm:$0xff]
        %v897 = vld [vmem:[#allocation2 + $0x9a] sm:$0xff]
        %v898 = vld [vmem:[#allocation2 + $0xaa] sm:$0xff]
        %v899 = vld [vmem:[#allocation2 + $0xb2] sm:$0xff]
        %v900 = vld [vmem:[#allocation2 + $0xc2] sm:$0xff]
        %v901 = vld [vmem:[#allocation2 + $0xca] sm:$0xff]
        %v902 = vld [vmem:[#allocation2 + $0xda] sm:$0xff]
        %v903 = vld [vmem:[#allocation2 + $0xe2] sm:$0xff]
        %v904 = vld [vmem:[#allocation2 + $0xf2] sm:$0xff]
        %v905 = vld [vmem:[#allocation2 + $0xfa] sm:$0xff]
        %v906 = vld [vmem:[#allocation2 + $0x10a] sm:$0xff]
        %v907 = vld [vmem:[#allocation2 + $0x112] sm:$0xff]
        %v908 = vld [vmem:[#allocation2 + $0x122] sm:$0xff]
        %v909 = vld [vmem:[#allocation2 + $0x12a] sm:$0xff]
        %v910 = vld [vmem:[#allocation2 + $0x13a] sm:$0xff]
        %v911 = vld [vmem:[#allocation2 + $0x142] sm:$0xff]
        %s912 = scalar_lea.vmem %s3, 2
        %v913 = vld [vmem:[%s912] sm:$0x1]
        %v915 = vlaneseq
        %v916 = vshrl.u32 %v915, 7
        %v917 = vsub.s32 0, %v916
        %v918 = vrot.slane %v913, %v917
        %v920 = vmul.f32 %v884, %v918
        %v921 = vmul.f32 %v885, %v918
        %v922 = vmul.f32 %v886, %v918
        %v923 = vmul.f32 %v887, %v918
        %v924 = vmul.f32 %v888, %v918
        %v925 = vmul.f32 %v889, %v918
        %v926 = vmul.f32 %v890, %v918
        %v927 = vmul.f32 %v891, %v918
        %v928 = vmul.f32 %v892, %v918
        %v929 = vmul.f32 %v893, %v918
        %v930 = vmul.f32 %v894, %v918
        %v931 = vmul.f32 %v895, %v918
        %v932 = vmul.f32 %v896, %v918
        %v933 = vmul.f32 %v897, %v918
        %v934 = vmul.f32 %v898, %v918
        %v935 = vmul.f32 %v899, %v918
        %v936 = vmul.f32 %v900, %v918
        %v937 = vmul.f32 %v901, %v918
        %v938 = vmul.f32 %v902, %v918
        %v939 = vmul.f32 %v903, %v918
        %v940 = vmul.f32 %v904, %v918
        %v941 = vmul.f32 %v905, %v918
        %v942 = vmul.f32 %v906, %v918
        %v943 = vmul.f32 %v907, %v918
        %v944 = vmul.f32 %v908, %v918
        %v945 = vmul.f32 %v909, %v918
        %v946 = vmul.f32 %v910, %v918
        %v947 = vmul.f32 %v911, %v918
        %v948 = vadd.f32 %v856, %v920
        %v949 = vadd.f32 %v857, %v921
        %v950 = vadd.f32 %v858, %v922
        %v951 = vadd.f32 %v859, %v923
        %v952 = vadd.f32 %v860, %v924
        %v953 = vadd.f32 %v861, %v925
        %v954 = vadd.f32 %v862, %v926
        %v955 = vadd.f32 %v863, %v927
        %v956 = vadd.f32 %v864, %v928
        %v957 = vadd.f32 %v865, %v929
        %v958 = vadd.f32 %v866, %v930
        %v959 = vadd.f32 %v867, %v931
        %v960 = vadd.f32 %v868, %v932
        %v961 = vadd.f32 %v869, %v933
        %v962 = vadd.f32 %v870, %v934
        %v963 = vadd.f32 %v871, %v935
        %v964 = vadd.f32 %v872, %v936
        %v965 = vadd.f32 %v873, %v937
        %v966 = vadd.f32 %v874, %v938
        %v967 = vadd.f32 %v875, %v939
        %v968 = vadd.f32 %v876, %v940
        %v969 = vadd.f32 %v877, %v941
        %v970 = vadd.f32 %v878, %v942
        %v971 = vadd.f32 %v879, %v943
        %v972 = vadd.f32 %v880, %v944
        %v973 = vadd.f32 %v881, %v945
        %v974 = vadd.f32 %v882, %v946
        %v975 = vadd.f32 %v883, %v947
        %v976 = vld [vmem:[%s700] sm:$0xff]
        %v977 = vld [vmem:[%s700 + $0x8] sm:$0xff]
        %v978 = vld [vmem:[%s700 + $0x18] sm:$0xff]
        %v979 = vld [vmem:[%s700 + $0x20] sm:$0xff]
        %v980 = vld [vmem:[%s700 + $0x30] sm:$0xff]
        %v981 = vld [vmem:[%s700 + $0x38] sm:$0xff]
        %v982 = vld [vmem:[%s700 + $0x48] sm:$0xff]
        %v983 = vld [vmem:[%s700 + $0x50] sm:$0xff]
        %v984 = vld [vmem:[%s700 + $0x60] sm:$0xff]
        %v985 = vld [vmem:[%s700 + $0x68] sm:$0xff]
        %v986 = vld [vmem:[%s700 + $0x78] sm:$0xff]
        %v987 = vld [vmem:[%s700 + $0x80] sm:$0xff]
        %v988 = vld [vmem:[%s700 + $0x90] sm:$0xff]
        %v989 = vld [vmem:[%s700 + $0x98] sm:$0xff]
        %v990 = vld [vmem:[%s700 + $0xa8] sm:$0xff]
        %v991 = vld [vmem:[%s700 + $0xb0] sm:$0xff]
        %v992 = vld [vmem:[%s700 + $0xc0] sm:$0xff]
        %v993 = vld [vmem:[%s700 + $0xc8] sm:$0xff]
        %v994 = vld [vmem:[%s700 + $0xd8] sm:$0xff]
        %v995 = vld [vmem:[%s700 + $0xe0] sm:$0xff]
        %v996 = vld [vmem:[%s700 + $0xf0] sm:$0xff]
        %v997 = vld [vmem:[%s700 + $0xf8] sm:$0xff]
        %v998 = vld [vmem:[%s700 + $0x108] sm:$0xff]
        %v999 = vld [vmem:[%s700 + $0x110] sm:$0xff]
        %v1000 = vld [vmem:[%s700 + $0x120] sm:$0xff]
        %v1001 = vld [vmem:[%s700 + $0x128] sm:$0xff]
        %v1002 = vld [vmem:[%s700 + $0x138] sm:$0xff]
        %v1003 = vld [vmem:[%s700 + $0x140] sm:$0xff]
        %s1004 = scalar_lea.vmem %s3, 3
        %v1005 = vld [vmem:[%s1004] sm:$0x1]
        %v1007 = vlaneseq
        %v1008 = vshrl.u32 %v1007, 7
        %v1009 = vsub.s32 0, %v1008
        %v1010 = vrot.slane %v1005, %v1009
        %v1012 = vmul.f32 %v976, %v1010
        %v1013 = vmul.f32 %v977, %v1010
        %v1014 = vmul.f32 %v978, %v1010
        %v1015 = vmul.f32 %v979, %v1010
        %v1016 = vmul.f32 %v980, %v1010
        %v1017 = vmul.f32 %v981, %v1010
        %v1018 = vmul.f32 %v982, %v1010
        %v1019 = vmul.f32 %v983, %v1010
        %v1020 = vmul.f32 %v984, %v1010
        %v1021 = vmul.f32 %v985, %v1010
        %v1022 = vmul.f32 %v986, %v1010
        %v1023 = vmul.f32 %v987, %v1010
        %v1024 = vmul.f32 %v988, %v1010
        %v1025 = vmul.f32 %v989, %v1010
        %v1026 = vmul.f32 %v990, %v1010
        %v1027 = vmul.f32 %v991, %v1010
        %v1028 = vmul.f32 %v992, %v1010
        %v1029 = vmul.f32 %v993, %v1010
        %v1030 = vmul.f32 %v994, %v1010
        %v1031 = vmul.f32 %v995, %v1010
        %v1032 = vmul.f32 %v996, %v1010
        %v1033 = vmul.f32 %v997, %v1010
        %v1034 = vmul.f32 %v998, %v1010
        %v1035 = vmul.f32 %v999, %v1010
        %v1036 = vmul.f32 %v1000, %v1010
        %v1037 = vmul.f32 %v1001, %v1010
        %v1038 = vmul.f32 %v1002, %v1010
        %v1039 = vmul.f32 %v1003, %v1010
        %v1040 = vadd.f32 %v948, %v1012
        %v1041 = vadd.f32 %v949, %v1013
        %v1042 = vadd.f32 %v950, %v1014
        %v1043 = vadd.f32 %v951, %v1015
        %v1044 = vadd.f32 %v952, %v1016
        %v1045 = vadd.f32 %v953, %v1017
        %v1046 = vadd.f32 %v954, %v1018
        %v1047 = vadd.f32 %v955, %v1019
        %v1048 = vadd.f32 %v956, %v1020
        %v1049 = vadd.f32 %v957, %v1021
        %v1050 = vadd.f32 %v958, %v1022
        %v1051 = vadd.f32 %v959, %v1023
        %v1052 = vadd.f32 %v960, %v1024
        %v1053 = vadd.f32 %v961, %v1025
        %v1054 = vadd.f32 %v962, %v1026
        %v1055 = vadd.f32 %v963, %v1027
        %v1056 = vadd.f32 %v964, %v1028
        %v1057 = vadd.f32 %v965, %v1029
        %v1058 = vadd.f32 %v966, %v1030
        %v1059 = vadd.f32 %v967, %v1031
        %v1060 = vadd.f32 %v968, %v1032
        %v1061 = vadd.f32 %v969, %v1033
        %v1062 = vadd.f32 %v970, %v1034
        %v1063 = vadd.f32 %v971, %v1035
        %v1064 = vadd.f32 %v972, %v1036
        %v1065 = vadd.f32 %v973, %v1037
        %v1066 = vadd.f32 %v974, %v1038
        %v1067 = vadd.f32 %v975, %v1039
        %v1068 = vld [vmem:[%s700 + $0x1] sm:$0xff]
        %v1069 = vld [vmem:[%s700 + $0x9] sm:$0xff]
        %v1070 = vld [vmem:[%s700 + $0x19] sm:$0xff]
        %v1071 = vld [vmem:[%s700 + $0x21] sm:$0xff]
        %v1072 = vld [vmem:[%s700 + $0x31] sm:$0xff]
        %v1073 = vld [vmem:[%s700 + $0x39] sm:$0xff]
        %v1074 = vld [vmem:[%s700 + $0x49] sm:$0xff]
        %v1075 = vld [vmem:[%s700 + $0x51] sm:$0xff]
        %v1076 = vld [vmem:[%s700 + $0x61] sm:$0xff]
        %v1077 = vld [vmem:[%s700 + $0x69] sm:$0xff]
        %v1078 = vld [vmem:[%s700 + $0x79] sm:$0xff]
        %v1079 = vld [vmem:[%s700 + $0x81] sm:$0xff]
        %v1080 = vld [vmem:[%s700 + $0x91] sm:$0xff]
        %v1081 = vld [vmem:[%s700 + $0x99] sm:$0xff]
        %v1082 = vld [vmem:[%s700 + $0xa9] sm:$0xff]
        %v1083 = vld [vmem:[%s700 + $0xb1] sm:$0xff]
        %v1084 = vld [vmem:[%s700 + $0xc1] sm:$0xff]
        %v1085 = vld [vmem:[%s700 + $0xc9] sm:$0xff]
        %v1086 = vld [vmem:[%s700 + $0xd9] sm:$0xff]
        %v1087 = vld [vmem:[%s700 + $0xe1] sm:$0xff]
        %v1088 = vld [vmem:[%s700 + $0xf1] sm:$0xff]
        %v1089 = vld [vmem:[%s700 + $0xf9] sm:$0xff]
        %v1090 = vld [vmem:[%s700 + $0x109] sm:$0xff]
        %v1091 = vld [vmem:[%s700 + $0x111] sm:$0xff]
        %v1092 = vld [vmem:[%s700 + $0x121] sm:$0xff]
        %v1093 = vld [vmem:[%s700 + $0x129] sm:$0xff]
        %v1094 = vld [vmem:[%s700 + $0x139] sm:$0xff]
        %v1095 = vld [vmem:[%s700 + $0x141] sm:$0xff]
        %s1096 = scalar_lea.vmem %s3, 4
        %v1097 = vld [vmem:[%s1096] sm:$0x1]
        %v1099 = vlaneseq
        %v1100 = vshrl.u32 %v1099, 7
        %v1101 = vsub.s32 0, %v1100
        %v1102 = vrot.slane %v1097, %v1101
        %v1104 = vmul.f32 %v1068, %v1102
        %v1105 = vmul.f32 %v1069, %v1102
        %v1106 = vmul.f32 %v1070, %v1102
        %v1107 = vmul.f32 %v1071, %v1102
        %v1108 = vmul.f32 %v1072, %v1102
        %v1109 = vmul.f32 %v1073, %v1102
        %v1110 = vmul.f32 %v1074, %v1102
        %v1111 = vmul.f32 %v1075, %v1102
        %v1112 = vmul.f32 %v1076, %v1102
        %v1113 = vmul.f32 %v1077, %v1102
        %v1114 = vmul.f32 %v1078, %v1102
        %v1115 = vmul.f32 %v1079, %v1102
        %v1116 = vmul.f32 %v1080, %v1102
        %v1117 = vmul.f32 %v1081, %v1102
        %v1118 = vmul.f32 %v1082, %v1102
        %v1119 = vmul.f32 %v1083, %v1102
        %v1120 = vmul.f32 %v1084, %v1102
        %v1121 = vmul.f32 %v1085, %v1102
        %v1122 = vmul.f32 %v1086, %v1102
        %v1123 = vmul.f32 %v1087, %v1102
        %v1124 = vmul.f32 %v1088, %v1102
        %v1125 = vmul.f32 %v1089, %v1102
        %v1126 = vmul.f32 %v1090, %v1102
        %v1127 = vmul.f32 %v1091, %v1102
        %v1128 = vmul.f32 %v1092, %v1102
        %v1129 = vmul.f32 %v1093, %v1102
        %v1130 = vmul.f32 %v1094, %v1102
        %v1131 = vmul.f32 %v1095, %v1102
        %v1132 = vadd.f32 %v1040, %v1104
        %v1133 = vadd.f32 %v1041, %v1105
        %v1134 = vadd.f32 %v1042, %v1106
        %v1135 = vadd.f32 %v1043, %v1107
        %v1136 = vadd.f32 %v1044, %v1108
        %v1137 = vadd.f32 %v1045, %v1109
        %v1138 = vadd.f32 %v1046, %v1110
        %v1139 = vadd.f32 %v1047, %v1111
        %v1140 = vadd.f32 %v1048, %v1112
        %v1141 = vadd.f32 %v1049, %v1113
        %v1142 = vadd.f32 %v1050, %v1114
        %v1143 = vadd.f32 %v1051, %v1115
        %v1144 = vadd.f32 %v1052, %v1116
        %v1145 = vadd.f32 %v1053, %v1117
        %v1146 = vadd.f32 %v1054, %v1118
        %v1147 = vadd.f32 %v1055, %v1119
        %v1148 = vadd.f32 %v1056, %v1120
        %v1149 = vadd.f32 %v1057, %v1121
        %v1150 = vadd.f32 %v1058, %v1122
        %v1151 = vadd.f32 %v1059, %v1123
        %v1152 = vadd.f32 %v1060, %v1124
        %v1153 = vadd.f32 %v1061, %v1125
        %v1154 = vadd.f32 %v1062, %v1126
        %v1155 = vadd.f32 %v1063, %v1127
        %v1156 = vadd.f32 %v1064, %v1128
        %v1157 = vadd.f32 %v1065, %v1129
        %v1158 = vadd.f32 %v1066, %v1130
        %v1159 = vadd.f32 %v1067, %v1131
        %v1160 = vld [vmem:[%s700 + $0x2] sm:$0xff]
        %v1161 = vld [vmem:[%s700 + $0xa] sm:$0xff]
        %v1162 = vld [vmem:[%s700 + $0x1a] sm:$0xff]
        %v1163 = vld [vmem:[%s700 + $0x22] sm:$0xff]
        %v1164 = vld [vmem:[%s700 + $0x32] sm:$0xff]
        %v1165 = vld [vmem:[%s700 + $0x3a] sm:$0xff]
        %v1166 = vld [vmem:[%s700 + $0x4a] sm:$0xff]
        %v1167 = vld [vmem:[%s700 + $0x52] sm:$0xff]
        %v1168 = vld [vmem:[%s700 + $0x62] sm:$0xff]
        %v1169 = vld [vmem:[%s700 + $0x6a] sm:$0xff]
        %v1170 = vld [vmem:[%s700 + $0x7a] sm:$0xff]
        %v1171 = vld [vmem:[%s700 + $0x82] sm:$0xff]
        %v1172 = vld [vmem:[%s700 + $0x92] sm:$0xff]
        %v1173 = vld [vmem:[%s700 + $0x9a] sm:$0xff]
        %v1174 = vld [vmem:[%s700 + $0xaa] sm:$0xff]
        %v1175 = vld [vmem:[%s700 + $0xb2] sm:$0xff]
        %v1176 = vld [vmem:[%s700 + $0xc2] sm:$0xff]
        %v1177 = vld [vmem:[%s700 + $0xca] sm:$0xff]
        %v1178 = vld [vmem:[%s700 + $0xda] sm:$0xff]
        %v1179 = vld [vmem:[%s700 + $0xe2] sm:$0xff]
        %v1180 = vld [vmem:[%s700 + $0xf2] sm:$0xff]
        %v1181 = vld [vmem:[%s700 + $0xfa] sm:$0xff]
        %v1182 = vld [vmem:[%s700 + $0x10a] sm:$0xff]
        %v1183 = vld [vmem:[%s700 + $0x112] sm:$0xff]
        %v1184 = vld [vmem:[%s700 + $0x122] sm:$0xff]
        %v1185 = vld [vmem:[%s700 + $0x12a] sm:$0xff]
        %v1186 = vld [vmem:[%s700 + $0x13a] sm:$0xff]
        %v1187 = vld [vmem:[%s700 + $0x142] sm:$0xff]
        %s1188 = scalar_lea.vmem %s3, 5
        %v1189 = vld [vmem:[%s1188] sm:$0x1]
        %v1191 = vlaneseq
        %v1192 = vshrl.u32 %v1191, 7
        %v1193 = vsub.s32 0, %v1192
        %v1194 = vrot.slane %v1189, %v1193
        %v1196 = vmul.f32 %v1160, %v1194
        %v1197 = vmul.f32 %v1161, %v1194
        %v1198 = vmul.f32 %v1162, %v1194
        %v1199 = vmul.f32 %v1163, %v1194
        %v1200 = vmul.f32 %v1164, %v1194
        %v1201 = vmul.f32 %v1165, %v1194
        %v1202 = vmul.f32 %v1166, %v1194
        %v1203 = vmul.f32 %v1167, %v1194
        %v1204 = vmul.f32 %v1168, %v1194
        %v1205 = vmul.f32 %v1169, %v1194
        %v1206 = vmul.f32 %v1170, %v1194
        %v1207 = vmul.f32 %v1171, %v1194
        %v1208 = vmul.f32 %v1172, %v1194
        %v1209 = vmul.f32 %v1173, %v1194
        %v1210 = vmul.f32 %v1174, %v1194
        %v1211 = vmul.f32 %v1175, %v1194
        %v1212 = vmul.f32 %v1176, %v1194
        %v1213 = vmul.f32 %v1177, %v1194
        %v1214 = vmul.f32 %v1178, %v1194
        %v1215 = vmul.f32 %v1179, %v1194
        %v1216 = vmul.f32 %v1180, %v1194
        %v1217 = vmul.f32 %v1181, %v1194
        %v1218 = vmul.f32 %v1182, %v1194
        %v1219 = vmul.f32 %v1183, %v1194
        %v1220 = vmul.f32 %v1184, %v1194
        %v1221 = vmul.f32 %v1185, %v1194
        %v1222 = vmul.f32 %v1186, %v1194
        %v1223 = vmul.f32 %v1187, %v1194
        %v1224 = vadd.f32 %v1132, %v1196
        %v1225 = vadd.f32 %v1133, %v1197
        %v1226 = vadd.f32 %v1134, %v1198
        %v1227 = vadd.f32 %v1135, %v1199
        %v1228 = vadd.f32 %v1136, %v1200
        %v1229 = vadd.f32 %v1137, %v1201
        %v1230 = vadd.f32 %v1138, %v1202
        %v1231 = vadd.f32 %v1139, %v1203
        %v1232 = vadd.f32 %v1140, %v1204
        %v1233 = vadd.f32 %v1141, %v1205
        %v1234 = vadd.f32 %v1142, %v1206
        %v1235 = vadd.f32 %v1143, %v1207
        %v1236 = vadd.f32 %v1144, %v1208
        %v1237 = vadd.f32 %v1145, %v1209
        %v1238 = vadd.f32 %v1146, %v1210
        %v1239 = vadd.f32 %v1147, %v1211
        %v1240 = vadd.f32 %v1148, %v1212
        %v1241 = vadd.f32 %v1149, %v1213
        %v1242 = vadd.f32 %v1150, %v1214
        %v1243 = vadd.f32 %v1151, %v1215
        %v1244 = vadd.f32 %v1152, %v1216
        %v1245 = vadd.f32 %v1153, %v1217
        %v1246 = vadd.f32 %v1154, %v1218
        %v1247 = vadd.f32 %v1155, %v1219
        %v1248 = vadd.f32 %v1156, %v1220
        %v1249 = vadd.f32 %v1157, %v1221
        %v1250 = vadd.f32 %v1158, %v1222
        %v1251 = vadd.f32 %v1159, %v1223
        %s1252 = scalar_lea.vmem [#allocation2], 48
        %v1253 = vld [vmem:[%s1252] sm:$0xff]
        %v1254 = vld [vmem:[%s1252 + $0x8] sm:$0xff]
        %v1255 = vld [vmem:[%s1252 + $0x18] sm:$0xff]
        %v1256 = vld [vmem:[%s1252 + $0x20] sm:$0xff]
        %v1257 = vld [vmem:[%s1252 + $0x30] sm:$0xff]
        %v1258 = vld [vmem:[%s1252 + $0x38] sm:$0xff]
        %v1259 = vld [vmem:[%s1252 + $0x48] sm:$0xff]
        %v1260 = vld [vmem:[%s1252 + $0x50] sm:$0xff]
        %v1261 = vld [vmem:[%s1252 + $0x60] sm:$0xff]
        %v1262 = vld [vmem:[%s1252 + $0x68] sm:$0xff]
        %v1263 = vld [vmem:[%s1252 + $0x78] sm:$0xff]
        %v1264 = vld [vmem:[%s1252 + $0x80] sm:$0xff]
        %v1265 = vld [vmem:[%s1252 + $0x90] sm:$0xff]
        %v1266 = vld [vmem:[%s1252 + $0x98] sm:$0xff]
        %v1267 = vld [vmem:[%s1252 + $0xa8] sm:$0xff]
        %v1268 = vld [vmem:[%s1252 + $0xb0] sm:$0xff]
        %v1269 = vld [vmem:[%s1252 + $0xc0] sm:$0xff]
        %v1270 = vld [vmem:[%s1252 + $0xc8] sm:$0xff]
        %v1271 = vld [vmem:[%s1252 + $0xd8] sm:$0xff]
        %v1272 = vld [vmem:[%s1252 + $0xe0] sm:$0xff]
        %v1273 = vld [vmem:[%s1252 + $0xf0] sm:$0xff]
        %v1274 = vld [vmem:[%s1252 + $0xf8] sm:$0xff]
        %v1275 = vld [vmem:[%s1252 + $0x108] sm:$0xff]
        %v1276 = vld [vmem:[%s1252 + $0x110] sm:$0xff]
        %v1277 = vld [vmem:[%s1252 + $0x120] sm:$0xff]
        %v1278 = vld [vmem:[%s1252 + $0x128] sm:$0xff]
        %v1279 = vld [vmem:[%s1252 + $0x138] sm:$0xff]
        %v1280 = vld [vmem:[%s1252 + $0x140] sm:$0xff]
        %s1281 = scalar_lea.vmem %s3, 6
        %v1282 = vld [vmem:[%s1281] sm:$0x1]
        %v1284 = vlaneseq
        %v1285 = vshrl.u32 %v1284, 7
        %v1286 = vsub.s32 0, %v1285
        %v1287 = vrot.slane %v1282, %v1286
        %v1289 = vmul.f32 %v1253, %v1287
        %v1290 = vmul.f32 %v1254, %v1287
        %v1291 = vmul.f32 %v1255, %v1287
        %v1292 = vmul.f32 %v1256, %v1287
        %v1293 = vmul.f32 %v1257, %v1287
        %v1294 = vmul.f32 %v1258, %v1287
        %v1295 = vmul.f32 %v1259, %v1287
        %v1296 = vmul.f32 %v1260, %v1287
        %v1297 = vmul.f32 %v1261, %v1287
        %v1298 = vmul.f32 %v1262, %v1287
        %v1299 = vmul.f32 %v1263, %v1287
        %v1300 = vmul.f32 %v1264, %v1287
        %v1301 = vmul.f32 %v1265, %v1287
        %v1302 = vmul.f32 %v1266, %v1287
        %v1303 = vmul.f32 %v1267, %v1287
        %v1304 = vmul.f32 %v1268, %v1287
        %v1305 = vmul.f32 %v1269, %v1287
        %v1306 = vmul.f32 %v1270, %v1287
        %v1307 = vmul.f32 %v1271, %v1287
        %v1308 = vmul.f32 %v1272, %v1287
        %v1309 = vmul.f32 %v1273, %v1287
        %v1310 = vmul.f32 %v1274, %v1287
        %v1311 = vmul.f32 %v1275, %v1287
        %v1312 = vmul.f32 %v1276, %v1287
        %v1313 = vmul.f32 %v1277, %v1287
        %v1314 = vmul.f32 %v1278, %v1287
        %v1315 = vmul.f32 %v1279, %v1287
        %v1316 = vmul.f32 %v1280, %v1287
        %v1317 = vadd.f32 %v1224, %v1289
        %v1318 = vadd.f32 %v1225, %v1290
        %v1319 = vadd.f32 %v1226, %v1291
        %v1320 = vadd.f32 %v1227, %v1292
        %v1321 = vadd.f32 %v1228, %v1293
        %v1322 = vadd.f32 %v1229, %v1294
        %v1323 = vadd.f32 %v1230, %v1295
        %v1324 = vadd.f32 %v1231, %v1296
        %v1325 = vadd.f32 %v1232, %v1297
        %v1326 = vadd.f32 %v1233, %v1298
        %v1327 = vadd.f32 %v1234, %v1299
        %v1328 = vadd.f32 %v1235, %v1300
        %v1329 = vadd.f32 %v1236, %v1301
        %v1330 = vadd.f32 %v1237, %v1302
        %v1331 = vadd.f32 %v1238, %v1303
        %v1332 = vadd.f32 %v1239, %v1304
        %v1333 = vadd.f32 %v1240, %v1305
        %v1334 = vadd.f32 %v1241, %v1306
        %v1335 = vadd.f32 %v1242, %v1307
        %v1336 = vadd.f32 %v1243, %v1308
        %v1337 = vadd.f32 %v1244, %v1309
        %v1338 = vadd.f32 %v1245, %v1310
        %v1339 = vadd.f32 %v1246, %v1311
        %v1340 = vadd.f32 %v1247, %v1312
        %v1341 = vadd.f32 %v1248, %v1313
        %v1342 = vadd.f32 %v1249, %v1314
        %v1343 = vadd.f32 %v1250, %v1315
        %v1344 = vadd.f32 %v1251, %v1316
        %v1345 = vld [vmem:[%s1252 + $0x1] sm:$0xff]
        %v1346 = vld [vmem:[%s1252 + $0x9] sm:$0xff]
        %v1347 = vld [vmem:[%s1252 + $0x19] sm:$0xff]
        %v1348 = vld [vmem:[%s1252 + $0x21] sm:$0xff]
        %v1349 = vld [vmem:[%s1252 + $0x31] sm:$0xff]
        %v1350 = vld [vmem:[%s1252 + $0x39] sm:$0xff]
        %v1351 = vld [vmem:[%s1252 + $0x49] sm:$0xff]
        %v1352 = vld [vmem:[%s1252 + $0x51] sm:$0xff]
        %v1353 = vld [vmem:[%s1252 + $0x61] sm:$0xff]
        %v1354 = vld [vmem:[%s1252 + $0x69] sm:$0xff]
        %v1355 = vld [vmem:[%s1252 + $0x79] sm:$0xff]
        %v1356 = vld [vmem:[%s1252 + $0x81] sm:$0xff]
        %v1357 = vld [vmem:[%s1252 + $0x91] sm:$0xff]
        %v1358 = vld [vmem:[%s1252 + $0x99] sm:$0xff]
        %v1359 = vld [vmem:[%s1252 + $0xa9] sm:$0xff]
        %v1360 = vld [vmem:[%s1252 + $0xb1] sm:$0xff]
        %v1361 = vld [vmem:[%s1252 + $0xc1] sm:$0xff]
        %v1362 = vld [vmem:[%s1252 + $0xc9] sm:$0xff]
        %v1363 = vld [vmem:[%s1252 + $0xd9] sm:$0xff]
        %v1364 = vld [vmem:[%s1252 + $0xe1] sm:$0xff]
        %v1365 = vld [vmem:[%s1252 + $0xf1] sm:$0xff]
        %v1366 = vld [vmem:[%s1252 + $0xf9] sm:$0xff]
        %v1367 = vld [vmem:[%s1252 + $0x109] sm:$0xff]
        %v1368 = vld [vmem:[%s1252 + $0x111] sm:$0xff]
        %v1369 = vld [vmem:[%s1252 + $0x121] sm:$0xff]
        %v1370 = vld [vmem:[%s1252 + $0x129] sm:$0xff]
        %v1371 = vld [vmem:[%s1252 + $0x139] sm:$0xff]
        %v1372 = vld [vmem:[%s1252 + $0x141] sm:$0xff]
        %s1373 = scalar_lea.vmem %s3, 7
        %v1374 = vld [vmem:[%s1373] sm:$0x1]
        %v1376 = vlaneseq
        %v1377 = vshrl.u32 %v1376, 7
        %v1378 = vsub.s32 0, %v1377
        %v1379 = vrot.slane %v1374, %v1378
        %v1381 = vmul.f32 %v1345, %v1379
        %v1382 = vmul.f32 %v1346, %v1379
        %v1383 = vmul.f32 %v1347, %v1379
        %v1384 = vmul.f32 %v1348, %v1379
        %v1385 = vmul.f32 %v1349, %v1379
        %v1386 = vmul.f32 %v1350, %v1379
        %v1387 = vmul.f32 %v1351, %v1379
        %v1388 = vmul.f32 %v1352, %v1379
        %v1389 = vmul.f32 %v1353, %v1379
        %v1390 = vmul.f32 %v1354, %v1379
        %v1391 = vmul.f32 %v1355, %v1379
        %v1392 = vmul.f32 %v1356, %v1379
        %v1393 = vmul.f32 %v1357, %v1379
        %v1394 = vmul.f32 %v1358, %v1379
        %v1395 = vmul.f32 %v1359, %v1379
        %v1396 = vmul.f32 %v1360, %v1379
        %v1397 = vmul.f32 %v1361, %v1379
        %v1398 = vmul.f32 %v1362, %v1379
        %v1399 = vmul.f32 %v1363, %v1379
        %v1400 = vmul.f32 %v1364, %v1379
        %v1401 = vmul.f32 %v1365, %v1379
        %v1402 = vmul.f32 %v1366, %v1379
        %v1403 = vmul.f32 %v1367, %v1379
        %v1404 = vmul.f32 %v1368, %v1379
        %v1405 = vmul.f32 %v1369, %v1379
        %v1406 = vmul.f32 %v1370, %v1379
        %v1407 = vmul.f32 %v1371, %v1379
        %v1408 = vmul.f32 %v1372, %v1379
        %v1409 = vadd.f32 %v1317, %v1381
        %v1410 = vadd.f32 %v1318, %v1382
        %v1411 = vadd.f32 %v1319, %v1383
        %v1412 = vadd.f32 %v1320, %v1384
        %v1413 = vadd.f32 %v1321, %v1385
        %v1414 = vadd.f32 %v1322, %v1386
        %v1415 = vadd.f32 %v1323, %v1387
        %v1416 = vadd.f32 %v1324, %v1388
        %v1417 = vadd.f32 %v1325, %v1389
        %v1418 = vadd.f32 %v1326, %v1390
        %v1419 = vadd.f32 %v1327, %v1391
        %v1420 = vadd.f32 %v1328, %v1392
        %v1421 = vadd.f32 %v1329, %v1393
        %v1422 = vadd.f32 %v1330, %v1394
        %v1423 = vadd.f32 %v1331, %v1395
        %v1424 = vadd.f32 %v1332, %v1396
        %v1425 = vadd.f32 %v1333, %v1397
        %v1426 = vadd.f32 %v1334, %v1398
        %v1427 = vadd.f32 %v1335, %v1399
        %v1428 = vadd.f32 %v1336, %v1400
        %v1429 = vadd.f32 %v1337, %v1401
        %v1430 = vadd.f32 %v1338, %v1402
        %v1431 = vadd.f32 %v1339, %v1403
        %v1432 = vadd.f32 %v1340, %v1404
        %v1433 = vadd.f32 %v1341, %v1405
        %v1434 = vadd.f32 %v1342, %v1406
        %v1435 = vadd.f32 %v1343, %v1407
        %v1436 = vadd.f32 %v1344, %v1408
        %v1437 = vld [vmem:[%s1252 + $0x2] sm:$0xff]
        %v1438 = vld [vmem:[%s1252 + $0xa] sm:$0xff]
        %v1439 = vld [vmem:[%s1252 + $0x1a] sm:$0xff]
        %v1440 = vld [vmem:[%s1252 + $0x22] sm:$0xff]
        %v1441 = vld [vmem:[%s1252 + $0x32] sm:$0xff]
        %v1442 = vld [vmem:[%s1252 + $0x3a] sm:$0xff]
        %v1443 = vld [vmem:[%s1252 + $0x4a] sm:$0xff]
        %v1444 = vld [vmem:[%s1252 + $0x52] sm:$0xff]
        %v1445 = vld [vmem:[%s1252 + $0x62] sm:$0xff]
        %v1446 = vld [vmem:[%s1252 + $0x6a] sm:$0xff]
        %v1447 = vld [vmem:[%s1252 + $0x7a] sm:$0xff]
        %v1448 = vld [vmem:[%s1252 + $0x82] sm:$0xff]
        %v1449 = vld [vmem:[%s1252 + $0x92] sm:$0xff]
        %v1450 = vld [vmem:[%s1252 + $0x9a] sm:$0xff]
        %v1451 = vld [vmem:[%s1252 + $0xaa] sm:$0xff]
        %v1452 = vld [vmem:[%s1252 + $0xb2] sm:$0xff]
        %v1453 = vld [vmem:[%s1252 + $0xc2] sm:$0xff]
        %v1454 = vld [vmem:[%s1252 + $0xca] sm:$0xff]
        %v1455 = vld [vmem:[%s1252 + $0xda] sm:$0xff]
        %v1456 = vld [vmem:[%s1252 + $0xe2] sm:$0xff]
        %v1457 = vld [vmem:[%s1252 + $0xf2] sm:$0xff]
        %v1458 = vld [vmem:[%s1252 + $0xfa] sm:$0xff]
        %v1459 = vld [vmem:[%s1252 + $0x10a] sm:$0xff]
        %v1460 = vld [vmem:[%s1252 + $0x112] sm:$0xff]
        %v1461 = vld [vmem:[%s1252 + $0x122] sm:$0xff]
        %v1462 = vld [vmem:[%s1252 + $0x12a] sm:$0xff]
        %v1463 = vld [vmem:[%s1252 + $0x13a] sm:$0xff]
        %v1464 = vld [vmem:[%s1252 + $0x142] sm:$0xff]
        %s1465 = scalar_lea.vmem %s3, 8
        %v1466 = vld [vmem:[%s1465] sm:$0x1]
        %v1468 = vlaneseq
        %v1469 = vshrl.u32 %v1468, 7
        %v1470 = vsub.s32 0, %v1469
        %v1471 = vrot.slane %v1466, %v1470
        %v1473 = vmul.f32 %v1437, %v1471
        %v1474 = vmul.f32 %v1438, %v1471
        %v1475 = vmul.f32 %v1439, %v1471
        %v1476 = vmul.f32 %v1440, %v1471
        %v1477 = vmul.f32 %v1441, %v1471
        %v1478 = vmul.f32 %v1442, %v1471
        %v1479 = vmul.f32 %v1443, %v1471
        %v1480 = vmul.f32 %v1444, %v1471
        %v1481 = vmul.f32 %v1445, %v1471
        %v1482 = vmul.f32 %v1446, %v1471
        %v1483 = vmul.f32 %v1447, %v1471
        %v1484 = vmul.f32 %v1448, %v1471
        %v1485 = vmul.f32 %v1449, %v1471
        %v1486 = vmul.f32 %v1450, %v1471
        %v1487 = vmul.f32 %v1451, %v1471
        %v1488 = vmul.f32 %v1452, %v1471
        %v1489 = vmul.f32 %v1453, %v1471
        %v1490 = vmul.f32 %v1454, %v1471
        %v1491 = vmul.f32 %v1455, %v1471
        %v1492 = vmul.f32 %v1456, %v1471
        %v1493 = vmul.f32 %v1457, %v1471
        %v1494 = vmul.f32 %v1458, %v1471
        %v1495 = vmul.f32 %v1459, %v1471
        %v1496 = vmul.f32 %v1460, %v1471
        %v1497 = vmul.f32 %v1461, %v1471
        %v1498 = vmul.f32 %v1462, %v1471
        %v1499 = vmul.f32 %v1463, %v1471
        %v1500 = vmul.f32 %v1464, %v1471
        %v1501 = vadd.f32 %v1409, %v1473
        %v1502 = vadd.f32 %v1410, %v1474
        %v1503 = vadd.f32 %v1411, %v1475
        %v1504 = vadd.f32 %v1412, %v1476
        %v1505 = vadd.f32 %v1413, %v1477
        %v1506 = vadd.f32 %v1414, %v1478
        %v1507 = vadd.f32 %v1415, %v1479
        %v1508 = vadd.f32 %v1416, %v1480
        %v1509 = vadd.f32 %v1417, %v1481
        %v1510 = vadd.f32 %v1418, %v1482
        %v1511 = vadd.f32 %v1419, %v1483
        %v1512 = vadd.f32 %v1420, %v1484
        %v1513 = vadd.f32 %v1421, %v1485
        %v1514 = vadd.f32 %v1422, %v1486
        %v1515 = vadd.f32 %v1423, %v1487
        %v1516 = vadd.f32 %v1424, %v1488
        %v1517 = vadd.f32 %v1425, %v1489
        %v1518 = vadd.f32 %v1426, %v1490
        %v1519 = vadd.f32 %v1427, %v1491
        %v1520 = vadd.f32 %v1428, %v1492
        %v1521 = vadd.f32 %v1429, %v1493
        %v1522 = vadd.f32 %v1430, %v1494
        %v1523 = vadd.f32 %v1431, %v1495
        %v1524 = vadd.f32 %v1432, %v1496
        %v1525 = vadd.f32 %v1433, %v1497
        %v1526 = vadd.f32 %v1434, %v1498
        %v1527 = vadd.f32 %v1435, %v1499
        %v1528 = vadd.f32 %v1436, %v1500
        %v1529 = vld [vmem:[%s4] sm:$0x1]
        %v1531 = vlaneseq
        %v1532 = vshrl.u32 %v1531, 7
        %v1533 = vsub.s32 0, %v1532
        %v1534 = vrot.slane %v1529, %v1533
        %v1536 = vadd.f32 %v1501, %v1534
        %v1537 = vadd.f32 %v1502, %v1534
        %v1538 = vadd.f32 %v1503, %v1534
        %v1539 = vadd.f32 %v1504, %v1534
        %v1540 = vadd.f32 %v1505, %v1534
        %v1541 = vadd.f32 %v1506, %v1534
        %v1542 = vadd.f32 %v1507, %v1534
        %v1543 = vadd.f32 %v1508, %v1534
        %v1544 = vadd.f32 %v1509, %v1534
        %v1545 = vadd.f32 %v1510, %v1534
        %v1546 = vadd.f32 %v1511, %v1534
        %v1547 = vadd.f32 %v1512, %v1534
        %v1548 = vadd.f32 %v1513, %v1534
        %v1549 = vadd.f32 %v1514, %v1534
        %v1550 = vadd.f32 %v1515, %v1534
        %v1551 = vadd.f32 %v1516, %v1534
        %v1552 = vadd.f32 %v1517, %v1534
        %v1553 = vadd.f32 %v1518, %v1534
        %v1554 = vadd.f32 %v1519, %v1534
        %v1555 = vadd.f32 %v1520, %v1534
        %v1556 = vadd.f32 %v1521, %v1534
        %v1557 = vadd.f32 %v1522, %v1534
        %v1558 = vadd.f32 %v1523, %v1534
        %v1559 = vadd.f32 %v1524, %v1534
        %v1560 = vadd.f32 %v1525, %v1534
        %v1561 = vadd.f32 %v1526, %v1534
        %v1562 = vadd.f32 %v1527, %v1534
        %v1563 = vadd.f32 %v1528, %v1534
        %v1564 = vmax.f32 %v1536, 0.0
        %v1565 = vmax.f32 %v1537, 0.0
        %v1566 = vmax.f32 %v1538, 0.0
        %v1567 = vmax.f32 %v1539, 0.0
        %v1568 = vmax.f32 %v1540, 0.0
        %v1569 = vmax.f32 %v1541, 0.0
        %v1570 = vmax.f32 %v1542, 0.0
        %v1571 = vmax.f32 %v1543, 0.0
        %v1572 = vmax.f32 %v1544, 0.0
        %v1573 = vmax.f32 %v1545, 0.0
        %v1574 = vmax.f32 %v1546, 0.0
        %v1575 = vmax.f32 %v1547, 0.0
        %v1576 = vmax.f32 %v1548, 0.0
        %v1577 = vmax.f32 %v1549, 0.0
        %v1578 = vmax.f32 %v1550, 0.0
        %v1579 = vmax.f32 %v1551, 0.0
        %v1580 = vmax.f32 %v1552, 0.0
        %v1581 = vmax.f32 %v1553, 0.0
        %v1582 = vmax.f32 %v1554, 0.0
        %v1583 = vmax.f32 %v1555, 0.0
        %v1584 = vmax.f32 %v1556, 0.0
        %v1585 = vmax.f32 %v1557, 0.0
        %v1586 = vmax.f32 %v1558, 0.0
        %v1587 = vmax.f32 %v1559, 0.0
        %v1588 = vmax.f32 %v1560, 0.0
        %v1589 = vmax.f32 %v1561, 0.0
        %v1590 = vmax.f32 %v1562, 0.0
        %v1591 = vmax.f32 %v1563, 0.0
        %v1592 = vpack.c.bf16 %v1565, %v1564
        %v1593 = vpack.c.bf16 %v1567, %v1566
        %v1594 = vpack.c.bf16 %v1569, %v1568
        %v1595 = vpack.c.bf16 %v1571, %v1570
        %v1596 = vpack.c.bf16 %v1573, %v1572
        %v1597 = vpack.c.bf16 %v1575, %v1574
        %v1598 = vpack.c.bf16 %v1577, %v1576
        %v1599 = vpack.c.bf16 %v1579, %v1578
        %v1600 = vpack.c.bf16 %v1581, %v1580
        %v1601 = vpack.c.bf16 %v1583, %v1582
        %v1602 = vpack.c.bf16 %v1585, %v1584
        %v1603 = vpack.c.bf16 %v1587, %v1586
        %v1604 = vpack.c.bf16 %v1589, %v1588
        %v1605 = vpack.c.bf16 %v1591, %v1590
        %v1606 = vld [vmem:[%s5] sm:$0xf]
        %v1607 = vld [vmem:[%s5 + $0x4] sm:$0xf]
        %v1608 = vld [vmem:[%s5 + $0x8] sm:$0xf]
        %v1609 = vld [vmem:[%s5 + $0xc] sm:$0xf]
        %v1610 = vld [vmem:[%s5 + $0x10] sm:$0xf]
        %v1611 = vld [vmem:[%s5 + $0x14] sm:$0xf]
        %v1612 = vld [vmem:[%s5 + $0x18] sm:$0xf]
        %v1613 = vld [vmem:[%s5 + $0x1c] sm:$0xf]
        %v1614 = vld [vmem:[%s5 + $0x20] sm:$0xf]
        %v1615 = vld [vmem:[%s5 + $0x24] sm:$0xf]
        %v1616 = vld [vmem:[%s5 + $0x28] sm:$0xf]
        %v1617 = vld [vmem:[%s5 + $0x2c] sm:$0xf]
        %v1618 = vld [vmem:[%s5 + $0x30] sm:$0xf]
        %v1619 = vld [vmem:[%s5 + $0x34] sm:$0xf]
        %v1620 = vld [vmem:[%s5 + $0x38] sm:$0xf]
        %v1621 = vld [vmem:[%s5 + $0x3c] sm:$0xf]
        %v1622 = vld [vmem:[%s6] sm:$0x1]
        %v1624 = vlaneseq
        %v1625 = vshrl.u32 %v1624, 7
        %v1626 = vsub.s32 0, %v1625
        %v1627 = vrot.slane %v1622, %v1626
        %v1645 = vunpack.c.l.b16 %v1606
        %v1646 = vunpack.c.l.b16 %v1607
        %v1647 = vunpack.c.l.b16 %v1608
        %v1648 = vunpack.c.l.b16 %v1609
        %v1649 = vunpack.c.l.b16 %v1610
        %v1650 = vunpack.c.l.b16 %v1611
        %v1651 = vunpack.c.l.b16 %v1612
        %v1652 = vunpack.c.l.b16 %v1613
        %v1653 = vunpack.c.l.b16 %v1614
        %v1654 = vunpack.c.l.b16 %v1615
        %v1655 = vunpack.c.l.b16 %v1616
        %v1656 = vunpack.c.l.b16 %v1617
        %v1657 = vunpack.c.l.b16 %v1618
        %v1658 = vunpack.c.l.b16 %v1619
        %v1659 = vunpack.c.l.b16 %v1620
        %v1660 = vunpack.c.l.b16 %v1621
        %v1661 = vpack.c.b16 %v1646, %v1645
        %v1662 = vpack.c.b16 %v1648, %v1647
        %v1663 = vpack.c.b16 %v1650, %v1649
        %v1664 = vpack.c.b16 %v1652, %v1651
        %v1665 = vpack.c.b16 %v1654, %v1653
        %v1666 = vpack.c.b16 %v1656, %v1655
        %v1667 = vpack.c.b16 %v1658, %v1657
        %v1668 = vpack.c.b16 %v1660, %v1659
        %1677 = vmatprep.subr.bf16.mxu0 0
        %1678 = vmatpush1.bf16.msra.mxu0 %v1661
        %1679 = vmatprep.subr.bf16.mxu0 0
        %1680 = vmatpush1.bf16.msra.mxu0 %v1662
        %1681 = vmatprep.subr.bf16.mxu0 0
        %1682 = vmatpush1.bf16.msra.mxu0 %v1663
        %1683 = vmatprep.subr.bf16.mxu0 0
        %1684 = vmatpush1.bf16.msra.mxu0 %v1664
        %1685 = vmatprep.subr.bf16.mxu0 0
        %1686 = vmatpush1.bf16.msra.mxu0 %v1665
        %1687 = vmatprep.subr.bf16.mxu0 0
        %1688 = vmatpush1.bf16.msra.mxu0 %v1666
        %1689 = vmatprep.subr.bf16.mxu0 0
        %1690 = vmatpush1.bf16.msra.mxu0 %v1667
        %1691 = vmatprep.subr.bf16.mxu0 0
        %1692 = vmatpush1.bf16.msra.mxu0 %v1668
        %1693 = vmatprep.subr.bf16.mxu0 0
        %1694 = vmatpush1.bf16.msra.mxu0 0
        %1695 = vmatprep.subr.bf16.mxu0 0
        %1696 = vmatpush1.bf16.msra.mxu0 0
        %1697 = vmatprep.subr.bf16.mxu0 0
        %1698 = vmatpush1.bf16.msra.mxu0 0
        %1699 = vmatprep.subr.bf16.mxu0 0
        %1700 = vmatpush1.bf16.msra.mxu0 0
        %1701 = vmatprep.subr.bf16.mxu0 0
        %1702 = vmatpush1.bf16.msra.mxu0 0
        %1703 = vmatprep.subr.bf16.mxu0 0
        %1704 = vmatpush1.bf16.msra.mxu0 0
        %1705 = vmatprep.subr.bf16.mxu0 0
        %1706 = vmatpush1.bf16.msra.mxu0 0
        %1707 = vmatprep.subr.bf16.mxu0 0
        %1708 = vmatpush1.bf16.msra.mxu0 0
        %1709 = vmatprep.mubr.bf16.mxu0 0
        %1710 = vmatmul.mubr.bf16.gmra.mrb[0].mxu0 %v1592
        %v1711 = vpop.f32.mrb[0].mxu0
        %v1712 = vadd.f32 %v1627, %v1711
        %v1713 = vpop.f32.mrb[0].mxu0
        %v1714 = vpop.f32.mrb[0].mxu0
        %v1715 = vadd.f32 %v1627, %v1714
        %v1716 = vpop.f32.mrb[0].mxu0
        %1717 = vmatprep.mubr.bf16.mxu0 0
        %1718 = vmatmul.mubr.bf16.gmra.mrb[0].mxu0 %v1593
        %v1719 = vpop.f32.mrb[0].mxu0
        %v1720 = vadd.f32 %v1627, %v1719
        %v1721 = vpop.f32.mrb[0].mxu0
        %v1722 = vpop.f32.mrb[0].mxu0
        %v1723 = vadd.f32 %v1627, %v1722
        %v1724 = vpop.f32.mrb[0].mxu0
        %1725 = vmatprep.mubr.bf16.mxu0 0
        %1726 = vmatmul.mubr.bf16.gmra.mrb[0].mxu0 %v1594
        %v1727 = vpop.f32.mrb[0].mxu0
        %v1728 = vadd.f32 %v1627, %v1727
        %v1729 = vpop.f32.mrb[0].mxu0
        %v1730 = vpop.f32.mrb[0].mxu0
        %v1731 = vadd.f32 %v1627, %v1730
        %v1732 = vpop.f32.mrb[0].mxu0
        %1733 = vmatprep.mubr.bf16.mxu0 0
        %1734 = vmatmul.mubr.bf16.gmra.mrb[0].mxu0 %v1595
        %v1735 = vpop.f32.mrb[0].mxu0
        %v1736 = vadd.f32 %v1627, %v1735
        %v1737 = vpop.f32.mrb[0].mxu0
        %v1738 = vpop.f32.mrb[0].mxu0
        %v1739 = vadd.f32 %v1627, %v1738
        %v1740 = vpop.f32.mrb[0].mxu0
        %1741 = vmatprep.mubr.bf16.mxu0 0
        %1742 = vmatmul.mubr.bf16.gmra.mrb[0].mxu0 %v1596
        %v1743 = vpop.f32.mrb[0].mxu0
        %v1744 = vadd.f32 %v1627, %v1743
        %v1745 = vpop.f32.mrb[0].mxu0
        %v1746 = vpop.f32.mrb[0].mxu0
        %v1747 = vadd.f32 %v1627, %v1746
        %v1748 = vpop.f32.mrb[0].mxu0
        %1749 = vmatprep.mubr.bf16.mxu0 0
        %1750 = vmatmul.mubr.bf16.gmra.mrb[0].mxu0 %v1597
        %v1751 = vpop.f32.mrb[0].mxu0
        %v1752 = vadd.f32 %v1627, %v1751
        %v1753 = vpop.f32.mrb[0].mxu0
        %v1754 = vpop.f32.mrb[0].mxu0
        %v1755 = vadd.f32 %v1627, %v1754
        %v1756 = vpop.f32.mrb[0].mxu0
        %1757 = vmatprep.mubr.bf16.mxu0 0
        %1758 = vmatmul.mubr.bf16.gmra.mrb[0].mxu0 %v1598
        %v1759 = vpop.f32.mrb[0].mxu0
        %v1760 = vadd.f32 %v1627, %v1759
        %v1761 = vpop.f32.mrb[0].mxu0
        %v1762 = vpop.f32.mrb[0].mxu0
        %v1763 = vadd.f32 %v1627, %v1762
        %v1764 = vpop.f32.mrb[0].mxu0
        %1765 = vmatprep.mubr.bf16.mxu0 0
        %1766 = vmatmul.mubr.bf16.gmra.mrb[0].mxu0 %v1599
        %v1767 = vpop.f32.mrb[0].mxu0
        %v1768 = vadd.f32 %v1627, %v1767
        %v1769 = vpop.f32.mrb[0].mxu0
        %v1770 = vpop.f32.mrb[0].mxu0
        %v1771 = vadd.f32 %v1627, %v1770
        %v1772 = vpop.f32.mrb[0].mxu0
        %1773 = vmatprep.mubr.bf16.mxu0 0
        %1774 = vmatmul.mubr.bf16.gmra.mrb[0].mxu0 %v1600
        %v1775 = vpop.f32.mrb[0].mxu0
        %v1776 = vadd.f32 %v1627, %v1775
        %v1777 = vpop.f32.mrb[0].mxu0
        %v1778 = vpop.f32.mrb[0].mxu0
        %v1779 = vadd.f32 %v1627, %v1778
        %v1780 = vpop.f32.mrb[0].mxu0
        %1781 = vmatprep.mubr.bf16.mxu0 0
        %1782 = vmatmul.mubr.bf16.gmra.mrb[0].mxu0 %v1601
        %v1783 = vpop.f32.mrb[0].mxu0
        %v1784 = vadd.f32 %v1627, %v1783
        %v1785 = vpop.f32.mrb[0].mxu0
        %v1786 = vpop.f32.mrb[0].mxu0
        %v1787 = vadd.f32 %v1627, %v1786
        %v1788 = vpop.f32.mrb[0].mxu0
        %1789 = vmatprep.mubr.bf16.mxu0 0
        %1790 = vmatmul.mubr.bf16.gmra.mrb[0].mxu0 %v1602
        %v1791 = vpop.f32.mrb[0].mxu0
        %v1792 = vadd.f32 %v1627, %v1791
        %v1793 = vpop.f32.mrb[0].mxu0
        %v1794 = vpop.f32.mrb[0].mxu0
        %v1795 = vadd.f32 %v1627, %v1794
        %v1796 = vpop.f32.mrb[0].mxu0
        %1797 = vmatprep.mubr.bf16.mxu0 0
        %1798 = vmatmul.mubr.bf16.gmra.mrb[0].mxu0 %v1603
        %v1799 = vpop.f32.mrb[0].mxu0
        %v1800 = vadd.f32 %v1627, %v1799
        %v1801 = vpop.f32.mrb[0].mxu0
        %v1802 = vpop.f32.mrb[0].mxu0
        %v1803 = vadd.f32 %v1627, %v1802
        %v1804 = vpop.f32.mrb[0].mxu0
        %1805 = vmatprep.mubr.bf16.mxu0 0
        %1806 = vmatmul.mubr.bf16.gmra.mrb[0].mxu0 %v1604
        %v1807 = vpop.f32.mrb[0].mxu0
        %v1808 = vadd.f32 %v1627, %v1807
        %v1809 = vpop.f32.mrb[0].mxu0
        %v1810 = vpop.f32.mrb[0].mxu0
        %v1811 = vadd.f32 %v1627, %v1810
        %v1812 = vpop.f32.mrb[0].mxu0
        %1813 = vmatprep.mubr.bf16.mxu0 0
        %1814 = vmatmul.mubr.bf16.gmra.mrb[0].mxu0 %v1605
        %v1815 = vpop.f32.mrb[0].mxu0
        %v1816 = vadd.f32 %v1627, %v1815
        %v1817 = vpop.f32.mrb[0].mxu0
        %v1818 = vpop.f32.mrb[0].mxu0
        %v1819 = vadd.f32 %v1627, %v1818
        %v1820 = vpop.f32.mrb[0].mxu0
        %1821 = vdwg.mxu0
        %v1822 = vmax.f32 %v1712, 0.0
        %v1823 = vmax.f32 %v1715, 0.0
        %v1824 = vmax.f32 %v1720, 0.0
        %v1825 = vmax.f32 %v1723, 0.0
        %v1826 = vmax.f32 %v1728, 0.0
        %v1827 = vmax.f32 %v1731, 0.0
        %v1828 = vmax.f32 %v1736, 0.0
        %v1829 = vmax.f32 %v1739, 0.0
        %v1830 = vmax.f32 %v1744, 0.0
        %v1831 = vmax.f32 %v1747, 0.0
        %v1832 = vmax.f32 %v1752, 0.0
        %v1833 = vmax.f32 %v1755, 0.0
        %v1834 = vmax.f32 %v1760, 0.0
        %v1835 = vmax.f32 %v1763, 0.0
        %v1836 = vmax.f32 %v1768, 0.0
        %v1837 = vmax.f32 %v1771, 0.0
        %v1838 = vmax.f32 %v1776, 0.0
        %v1839 = vmax.f32 %v1779, 0.0
        %v1840 = vmax.f32 %v1784, 0.0
        %v1841 = vmax.f32 %v1787, 0.0
        %v1842 = vmax.f32 %v1792, 0.0
        %v1843 = vmax.f32 %v1795, 0.0
        %v1844 = vmax.f32 %v1800, 0.0
        %v1845 = vmax.f32 %v1803, 0.0
        %v1846 = vmax.f32 %v1808, 0.0
        %v1847 = vmax.f32 %v1811, 0.0
        %v1848 = vmax.f32 %v1816, 0.0
        %v1849 = vmax.f32 %v1819, 0.0
        %v1850 = vsel %vm622, %v1822, 0.0
        %v1851 = vsel %vm623, %v1823, 0.0
        %v1852 = vsel %vm622, %v1824, 0.0
        %v1853 = vsel %vm623, %v1825, 0.0
        %v1854 = vsel %vm622, %v1826, 0.0
        %v1855 = vsel %vm623, %v1827, 0.0
        %v1856 = vsel %vm622, %v1828, 0.0
        %v1857 = vsel %vm623, %v1829, 0.0
        %v1858 = vsel %vm622, %v1830, 0.0
        %v1859 = vsel %vm623, %v1831, 0.0
        %v1860 = vsel %vm622, %v1832, 0.0
        %v1861 = vsel %vm623, %v1833, 0.0
        %v1862 = vsel %vm622, %v1834, 0.0
        %v1863 = vsel %vm623, %v1835, 0.0
        %v1864 = vsel %vm622, %v1836, 0.0
        %v1865 = vsel %vm623, %v1837, 0.0
        %v1866 = vsel %vm622, %v1838, 0.0
        %v1867 = vsel %vm623, %v1839, 0.0
        %v1868 = vsel %vm622, %v1840, 0.0
        %v1869 = vsel %vm623, %v1841, 0.0
        %v1870 = vsel %vm622, %v1842, 0.0
        %v1871 = vsel %vm623, %v1843, 0.0
        %v1872 = vsel %vm622, %v1844, 0.0
        %v1873 = vsel %vm623, %v1845, 0.0
        %v1874 = vsel %vm622, %v1846, 0.0
        %v1875 = vsel %vm623, %v1847, 0.0
        %v1876 = vsel %vm622, %v1848, 0.0
        %v1877 = vsel %vm623, %v1849, 0.0
        %v1878 = vpack.c.bf16 %v1851, %v1850
        %v1879 = vpack.c.bf16 %v1853, %v1852
        %v1880 = vpack.c.bf16 %v1855, %v1854
        %v1881 = vpack.c.bf16 %v1857, %v1856
        %v1882 = vpack.c.bf16 %v1859, %v1858
        %v1883 = vpack.c.bf16 %v1861, %v1860
        %v1884 = vpack.c.bf16 %v1863, %v1862
        %v1885 = vpack.c.bf16 %v1865, %v1864
        %v1886 = vpack.c.bf16 %v1867, %v1866
        %v1887 = vpack.c.bf16 %v1869, %v1868
        %v1888 = vpack.c.bf16 %v1871, %v1870
        %v1889 = vpack.c.bf16 %v1873, %v1872
        %v1890 = vpack.c.bf16 %v1875, %v1874
        %v1891 = vpack.c.bf16 %v1877, %v1876
        %v1906 = vunpack.c.l.b16 %v1878
        %v1907 = vunpack.c.h.b16 %v1878
        %v1908 = vunpack.c.l.b16 %v1879
        %v1909 = vunpack.c.h.b16 %v1879
        %v1910 = vunpack.c.l.b16 %v1880
        %v1911 = vunpack.c.h.b16 %v1880
        %v1912 = vunpack.c.l.b16 %v1881
        %v1913 = vunpack.c.h.b16 %v1881
        %v1914 = vunpack.c.l.b16 %v1882
        %v1915 = vunpack.c.h.b16 %v1882
        %v1916 = vunpack.c.l.b16 %v1883
        %v1917 = vunpack.c.h.b16 %v1883
        %v1918 = vunpack.c.l.b16 %v1884
        %v1919 = vunpack.c.h.b16 %v1884
        %v1920 = vunpack.c.l.b16 %v1885
        %v1921 = vunpack.c.h.b16 %v1885
        %v1922 = vunpack.c.l.b16 %v1886
        %v1923 = vunpack.c.h.b16 %v1886
        %v1924 = vunpack.c.l.b16 %v1887
        %v1925 = vunpack.c.h.b16 %v1887
        %v1926 = vunpack.c.l.b16 %v1888
        %v1927 = vunpack.c.h.b16 %v1888
        %v1928 = vunpack.c.l.b16 %v1889
        %v1929 = vunpack.c.h.b16 %v1889
        %v1930 = vunpack.c.l.b16 %v1890
        %v1931 = vunpack.c.h.b16 %v1890
        %v1932 = vunpack.c.l.b16 %v1891
        %v1933 = vunpack.c.h.b16 %v1891
        %v1934 = vpack.c.b16 %v1906, %v1906
        %v1935 = vpack.c.b16 %v1907, %v1907
        %v1936 = vpack.c.b16 %v1908, %v1908
        %v1937 = vpack.c.b16 %v1909, %v1909
        %v1938 = vpack.c.b16 %v1910, %v1910
        %v1939 = vpack.c.b16 %v1911, %v1911
        %v1940 = vpack.c.b16 %v1912, %v1912
        %v1941 = vpack.c.b16 %v1913, %v1913
        %v1942 = vpack.c.b16 %v1914, %v1914
        %v1943 = vpack.c.b16 %v1915, %v1915
        %v1944 = vpack.c.b16 %v1916, %v1916
        %v1945 = vpack.c.b16 %v1917, %v1917
        %v1946 = vpack.c.b16 %v1918, %v1918
        %v1947 = vpack.c.b16 %v1919, %v1919
        %v1948 = vpack.c.b16 %v1920, %v1920
        %v1949 = vpack.c.b16 %v1921, %v1921
        %v1950 = vpack.c.b16 %v1922, %v1922
        %v1951 = vpack.c.b16 %v1923, %v1923
        %v1952 = vpack.c.b16 %v1924, %v1924
        %v1953 = vpack.c.b16 %v1925, %v1925
        %v1954 = vpack.c.b16 %v1926, %v1926
        %v1955 = vpack.c.b16 %v1927, %v1927
        %v1956 = vpack.c.b16 %v1928, %v1928
        %v1957 = vpack.c.b16 %v1929, %v1929
        %v1958 = vpack.c.b16 %v1930, %v1930
        %v1959 = vpack.c.b16 %v1931, %v1931
        %v1960 = vpack.c.b16 %v1932, %v1932
        %v1961 = vpack.c.b16 %v1933, %v1933
        %1990 = vst [vmem:[%s271] sm:$0xf] %v1934
        %1991 = vst [vmem:[%s271 + $0x4] sm:$0xf] %v1935
        %1992 = vst [vmem:[%s271 + $0x8] sm:$0xf] %v1936
        %1993 = vst [vmem:[%s271 + $0xc] sm:$0xf] %v1937
        %1994 = vst [vmem:[%s271 + $0x10] sm:$0xf] %v1938
        %1995 = vst [vmem:[%s271 + $0x14] sm:$0xf] %v1939
        %1996 = vst [vmem:[%s271 + $0x18] sm:$0xf] %v1940
        %1997 = vst [vmem:[%s271 + $0x1c] sm:$0xf] %v1941
        %1998 = vst [vmem:[%s271 + $0x20] sm:$0xf] %v1942
        %1999 = vst [vmem:[%s271 + $0x24] sm:$0xf] %v1943
        %2000 = vst [vmem:[%s271 + $0x28] sm:$0xf] %v1944
        %2001 = vst [vmem:[%s271 + $0x2c] sm:$0xf] %v1945
        %2002 = vst [vmem:[%s271 + $0x30] sm:$0xf] %v1946
        %2003 = vst [vmem:[%s271 + $0x34] sm:$0xf] %v1947
        %2004 = vst [vmem:[%s271 + $0x38] sm:$0xf] %v1948
        %2005 = vst [vmem:[%s271 + $0x3c] sm:$0xf] %v1949
        %2006 = vst [vmem:[%s271 + $0x40] sm:$0xf] %v1950
        %2007 = vst [vmem:[%s271 + $0x44] sm:$0xf] %v1951
        %2008 = vst [vmem:[%s271 + $0x48] sm:$0xf] %v1952
        %2009 = vst [vmem:[%s271 + $0x4c] sm:$0xf] %v1953
        %2010 = vst [vmem:[%s271 + $0x50] sm:$0xf] %v1954
        %2011 = vst [vmem:[%s271 + $0x54] sm:$0xf] %v1955
        %2012 = vst [vmem:[%s271 + $0x58] sm:$0xf] %v1956
        %2013 = vst [vmem:[%s271 + $0x5c] sm:$0xf] %v1957
        %2014 = vst [vmem:[%s271 + $0x60] sm:$0xf] %v1958
        %2015 = vst [vmem:[%s271 + $0x64] sm:$0xf] %v1959
        %2016 = vst [vmem:[%s271 + $0x68] sm:$0xf] %v1960
        %2017 = vst [vmem:[%s271 + $0x6c] sm:$0xf] %v1961
        %s2018 = sand.u32 %s181, 1
        %s2019 = scalar_lea.sflag [#allocation4], %s2018
        %s2020 = sand.u32 %s181, 1
        %s2021 = smul.addr %s2020, 112
        %s2022 = scalar_lea.vmem [#allocation3], %s2021
        // Predicated region
        $region49: #{tpu_custom_call.1} parent=47 // pred_check
          %p2023 = pneg %p191
        $region50: #{tpu_custom_call.1} parent=47 // pred_check_branch
          %2025 = sbr.rel (%p2023) target = $region52
        $region51: #{tpu_custom_call.1} parent=47 // pred_region
          %s2027 = ssub.s32 1792, 1792
          %2028 = vsyncadd %s2019, %s2027
          %s2029 = smul.addr %s21, 28
          %s2030 = smul.addr %s2029, 64
          %s2031 = scalar_lea.hbm %s7, %s2030
          %s2032 = sshll.u32 %s2022, 4
          %s2033 = int_to_ptr.vmem [resolvable:$true] %s2032
          %2038 = dma.vmem_to_hbm [thread:$0]  %s2033, 1792, %s2031, %s2019, 64, 64, 4
        $region52: #{tpu_custom_call.1} parent=47 // pred_fallthru
          _
      $region48: #{tpu_custom_call.1} parent=5 // pred_fallthru
        _
      %p2039 = scmp.le.s32.totalorder 2, %s16
      // Predicated region
      $region53: #{tpu_custom_call.1} parent=5 // pred_check
        %p2040 = pneg %p2039
      $region54: #{tpu_custom_call.1} parent=5 // pred_check_branch
        %2042 = sbr.rel (%p2040) target = $region56
      $region55: #{tpu_custom_call.1} parent=5 // pred_region
        %s2043 = ssub.s32 %s16, 2
        // Predicated region
        $region57: #{tpu_custom_call.1} parent=55 // pred_check
          %p2044 = pneg %p197
        $region58: #{tpu_custom_call.1} parent=55 // pred_check_branch
          %2046 = sbr.rel (%p2044) target = $region60
        $region59: #{tpu_custom_call.1} parent=55 // pred_region
          %s2047 = sand.u32 %s182, 1
          %s2048 = scalar_lea.sflag [#allocation4], %s2047
          %s2049 = sand.u32 %s182, 1
          %s2050 = smul.addr %s2049, 112
          %s2051 = scalar_lea.vmem [#allocation3], %s2050
          %2052 = dma.done %s2048, 1792
        $region60: #{tpu_custom_call.1} parent=55 // pred_fallthru
          _
      $region56: #{tpu_custom_call.1} parent=5 // pred_fallthru
        _
    $region6: #{tpu_custom_call.1} parent=1 // loop_footer
      %s20 = sadd.s32 1, %s16
    $region7: #{tpu_custom_call.1} parent=1 // loop_footer_branch
      %15 = sbr.rel target = $region3
    $region8: #{tpu_custom_call.1} parent=1 // loop_exit
      _
    %2053 = vsyncpa [#allocation4], 1
    %s2054 = scalar_lea.sflag [#allocation4], 1
    %2055 = vsyncpa %s2054, 1

</llo_original>
